<compile_context>
chip_gen: v5e
topology: v5e:2x2
jax: 0.10.0
libtpu: 0.0.40
codegen_flags: <defaults>
</compile_context>

<pallas_src>
import jax
import jax.numpy as jnp
from jax.experimental import pallas as pl
from jax.experimental.pallas import tpu as pltpu


def relu_conv1x1_kernel(w_ref, x_ref, o_ref):
    # w_ref: (Co_blk, Ci) bf16  |  x_ref: (Ci, L) f32/bf16  |  o_ref: (Co_blk, L) f32
    x = jnp.maximum(x_ref[...], 0).astype(jnp.bfloat16)      # fused ReLU (VPU) + MXU cast
    o_ref[...] = jnp.dot(
        w_ref[...], x, preferred_element_type=jnp.float32     # 1x1 conv == matmul (MXU)
    ).astype(o_ref.dtype)


def prepare_conv1x1_weight(w_oihw):
    """(C_out, C_in, 1, 1) -> (C_out, C_in) bf16. Done once at init, off the per-call path."""
    Co, Ci, kh, kw = w_oihw.shape
    assert (kh, kw) == (1, 1)
    return w_oihw.reshape(Co, Ci).astype(jnp.bfloat16)


def relu_conv2d_1x1(x_nchw, w_mat):
    """ReLU followed by 1x1 conv (no bias). NCHW in / NCHW out. w_mat: (C_out, C_in) bf16."""
    N, C, H, W = x_nchw.shape
    Co, Ci = w_mat.shape
    assert Ci == C
    HW = H * W
    L = N * HW

    # Fold batch + spatial into the matmul N dimension (single dot for the whole call).
    if N == 1:
        x_mat = x_nchw.reshape(C, HW)                                   # free reshape
    else:
        # One transpose for N > 1; amortizes across the batch (per review).
        x_mat = jnp.transpose(x_nchw.reshape(N, C, HW), (1, 0, 2)).reshape(C, L)

    # Split C_out for v7x dual-TC parallelism (harmless / pipeline-friendly on v5e/v6e).
    co_blk = Co // 2 if (Co % 2 == 0 and (Co // 2) % 8 == 0) else Co
    n_co = Co // co_blk

    cost = pl.CostEstimate(
        flops=2 * Co * C * L,
        transcendentals=0,
        bytes_accessed=C * L * x_mat.dtype.itemsize + Co * C * 2 + Co * L * 4,
    )

    out = pl.pallas_call(
        relu_conv1x1_kernel,
        out_shape=jax.ShapeDtypeStruct((Co, L), jnp.float32),
        grid=(n_co,),
        in_specs=[
            pl.BlockSpec((co_blk, C), lambda i: (i, 0)),   # weight half per step
            pl.BlockSpec((C, L), lambda i: (0, 0)),        # x: constant index -> resident
        ],
        out_specs=pl.BlockSpec((co_blk, L), lambda i: (i, 0)),
        compiler_params=pltpu.CompilerParams(
            dimension_semantics=("parallel",),             # shard Co halves across TCs (v7x)
        ),
        cost_estimate=cost,
    )(w_mat, x_mat)

    # Fold back to NCHW (free reshape for N == 1).
    if N == 1:
        return out.reshape(1, Co, H, W)
    return jnp.transpose(out.reshape(Co, N, HW), (1, 0, 2)).reshape(N, Co, H, W)


if __name__ == "__main__":
    key = jax.random.PRNGKey(0)
    kx, kw = jax.random.split(key)

    # Shapes implied by the module: input (1, 1584, 7, 7), weight (192, 1584, 1, 1)
    N, C_in, H, W = 1, 1584, 7, 7
    C_out = 192

    x = jax.random.normal(kx, (N, C_in, H, W), dtype=jnp.float32)
    w = jax.random.normal(kw, (C_out, C_in, 1, 1), dtype=jnp.float32) * 0.02

    w_mat = prepare_conv1x1_weight(w)     # weight layout + bf16 cast once, not per forward
    out = relu_conv2d_1x1(x, w_mat)
    out = jax.block_until_ready(out)

    # Reference in plain f32 JAX. Tolerance loosened for bf16 operands / f32 accumulate.
    ref = jnp.einsum("nchw,oc->nohw", jnp.maximum(x, 0.0), w.reshape(C_out, C_in))
    assert out.shape == (N, C_out, H, W), out.shape
    assert jnp.allclose(out, ref, atol=3e-2, rtol=3e-2), "mismatch vs reference"

    print("KERNEL_OK")
</pallas_src>

<mosaic_0001>
module attributes {stable_mosaic.version = 11 : i64} {
  func.func @relu_conv1x1_kernel(%arg0: i32, %arg1: memref<96x1584xbf16, #tpu.memory_space<vmem>>, %arg2: memref<1584x49xf32, #tpu.memory_space<vmem>>, %arg3: memref<96x49xf32, #tpu.memory_space<vmem>>) attributes {dimension_semantics = [#tpu.dimension_semantics<parallel>], iteration_bounds = array<i64: 2>, scalar_prefetch = 0 : i64, scratch_operands = 0 : i64, tpu.core_type = #tpu.core_type<tc>, window_params = [{transform_indices = @transform_0, window_bounds = array<i64: 96, 1584>}, {pipeline_mode = #tpu.pipeline_mode<synchronous>, transform_indices = @transform_1, window_bounds = array<i64: 1584, 49>}, {transform_indices = @transform_2, window_bounds = array<i64: 96, 49>}]} {
    %c0 = arith.constant 0 : index
    %c0_0 = arith.constant 0 : index
    %0 = vector.load %arg2[%c0, %c0_0] : memref<1584x49xf32, #tpu.memory_space<vmem>>, vector<1584x49xf32>
    %cst = arith.constant 0.000000e+00 : f32
    %1 = vector.broadcast %cst : f32 to vector<1584x49xf32>
    %2 = arith.maximumf %0, %1 : vector<1584x49xf32>
    %3 = arith.truncf %2 : vector<1584x49xf32> to vector<1584x49xbf16>
    %c0_1 = arith.constant 0 : index
    %c0_2 = arith.constant 0 : index
    %4 = vector.load %arg1[%c0_1, %c0_2] : memref<96x1584xbf16, #tpu.memory_space<vmem>>, vector<96x1584xbf16>
    %cst_3 = arith.constant dense<0.000000e+00> : vector<96x49xf32>
    %5 = tpu.matmul %4, %3, %cst_3 {dimension_numbers = #tpu.dot_dimension_numbers<[1], [0], [0], [1], [0, 0, 1, 1], [], []>} : vector<96x1584xbf16>, vector<1584x49xbf16>, vector<96x49xf32> -> vector<96x49xf32>
    %c0_4 = arith.constant 0 : index
    %c0_5 = arith.constant 0 : index
    %6 = vector.load %arg3[%c0_4, %c0_5] : memref<96x49xf32, #tpu.memory_space<vmem>>, vector<96x49xf32>
    tpu.vector_store %arg3[%c0_4, %c0_5], %5 {strides = array<i32>} : memref<96x49xf32, #tpu.memory_space<vmem>>, vector<96x49xf32>,
    return
  }
  func.func @transform_0(%arg0: i32) -> (i32, i32) {
    %c0_i32 = arith.constant 0 : i32
    %c0_i32_0 = arith.constant 0 : i32
    return %arg0, %c0_i32 : i32, i32
  }
  func.func @transform_1(%arg0: i32) -> (i32, i32) {
    %c0_i32 = arith.constant 0 : i32
    %c0_i32_0 = arith.constant 0 : i32
    %c0_i32_1 = arith.constant 0 : i32
    return %c0_i32, %c0_i32_0 : i32, i32
  }
  func.func @transform_2(%arg0: i32) -> (i32, i32) {
    %c0_i32 = arith.constant 0 : i32
    %c0_i32_0 = arith.constant 0 : i32
    return %arg0, %c0_i32 : i32, i32
  }
}

</mosaic_0001>

<llo_original>
// kernel: tpu_custom_call.1
$region0: #{tpu_custom_call.1}
  #allocation0 [shape = 'u32[]', space=smem, size = 0x4, offset = 0x4, fixed_abs, tag = 'smem constant byte address 0x4 - core index']
  #allocation1 [shape = 'u32[72,128]{1,0:T(1,128)}', space=vmem, size = 0x9000, scoped, tag = 'internal scratch']
  %s0 = inlined_call_operand.vmem [shape: bf16[192,1584], index: 0, kind: input, shape index: {}]
  %s1 = inlined_call_operand.vmem [shape: f32[1584,49], index: 1, kind: input, shape index: {}]
  %s2 = inlined_call_operand.vmem [shape: f32[192,49], index: 2, kind: output, shape index: {}]
  %s3 = sld [smem:[#allocation0]]
  $region41: #{tpu_custom_call.1} parent=0
    _
  %s5 = ssub.s32 1, %s3
  %s6 = scalar_select 0, %s5, %s3
  loop: start=0, step=1, limit=4
  $region2: #{tpu_custom_call.1} parent=0 // loop_pre_header
    _
  $region3: #{tpu_custom_call.1} parent=0 // loop_header
    %s8 = sphi 0, %s12
    %p9 = scmp.ge.s32.totalorder %s8, 4
    %s18 = sphi 0, %s20
    %s21 = sphi 0, %s18
    %s22 = sphi 0, %s21
    %s38 = sphi 0, %s22
    %s42 = sphi 0, %s42
    %s44 = sphi 0, %s42
    %s45 = sphi 0, %s44
    %s59 = sphi 0, %s45
    %s65 = sphi 0, %s67
    %s68 = sphi 0, %s65
    %s69 = sphi 0, %s68
    %s85 = sphi 0, %s69
  $region4: #{tpu_custom_call.1} parent=0 // loop_header_branch
    %11 = sbr.rel (%p9) target = $region8
  $region5: #{tpu_custom_call.1} parent=0 // loop_body
    %s13 = ssub.s32 %s8, 1
    %s14 = ssub.s32 %s8, 2
    %s15 = sadd.s32 %s8, 1
    %s16 = ssub.s32 %s8, %s15
    %p17 = scmp.eq.s32.totalorder %s16, 0
    %s19 = sadd.s32 %s18, 1
    %s20 = scalar_select %p17, %s18, %s19
    %p23 = pneg %p17
    %p24 = scmp.eq.s32.totalorder %s8, 1
    %p25 = por %p23, %p24
    %p26 = scmp.ne.s32.totalorder %s18, %s21
    %p27 = scmp.eq.s32.totalorder %s8, 0
    %p28 = por %p26, %p27
    %p29 = scmp.ne.s32.totalorder %s18, %s21
    %p30 = scmp.eq.s32.totalorder %s13, 1
    %p31 = por %p29, %p30
    %p32 = scmp.ne.s32.totalorder %s21, %s22
    %p33 = scmp.eq.s32.totalorder %s13, 0
    %p34 = por %p32, %p33
    %p35 = scmp.ne.s32.totalorder %s21, %s22
    %p36 = scmp.eq.s32.totalorder %s14, 1
    %p37 = por %p35, %p36
    %p39 = scmp.ne.s32.totalorder %s22, %s38
    %p40 = scmp.eq.s32.totalorder %s14, 0
    %p41 = por %p39, %p40
    %s43 = sadd.s32 %s42, 1
    %p46 = scmp.eq.s32.totalorder %s8, 1
    %p47 = scmp.ne.s32.totalorder %s42, %s44
    %p48 = scmp.eq.s32.totalorder %s8, 0
    %p49 = por %p47, %p48
    %p50 = scmp.ne.s32.totalorder %s42, %s44
    %p51 = scmp.eq.s32.totalorder %s13, 1
    %p52 = por %p50, %p51
    %p53 = scmp.ne.s32.totalorder %s44, %s45
    %p54 = scmp.eq.s32.totalorder %s13, 0
    %p55 = por %p53, %p54
    %p56 = scmp.ne.s32.totalorder %s44, %s45
    %p57 = scmp.eq.s32.totalorder %s14, 1
    %p58 = por %p56, %p57
    %p60 = scmp.ne.s32.totalorder %s45, %s59
    %p61 = scmp.eq.s32.totalorder %s14, 0
    %p62 = por %p60, %p61
    %s63 = ssub.s32 %s8, %s15
    %p64 = scmp.eq.s32.totalorder %s63, 0
    %s66 = sadd.s32 %s65, 1
    %s67 = scalar_select %p64, %s65, %s66
    %p70 = pneg %p64
    %p71 = scmp.eq.s32.totalorder %s8, 1
    %p72 = por %p70, %p71
    %p73 = scmp.ne.s32.totalorder %s65, %s68
    %p74 = scmp.eq.s32.totalorder %s8, 0
    %p75 = por %p73, %p74
    %p76 = scmp.ne.s32.totalorder %s65, %s68
    %p77 = scmp.eq.s32.totalorder %s13, 1
    %p78 = por %p76, %p77
    %p79 = scmp.ne.s32.totalorder %s68, %s69
    %p80 = scmp.eq.s32.totalorder %s13, 0
    %p81 = por %p79, %p80
    %p82 = scmp.ne.s32.totalorder %s68, %s69
    %p83 = scmp.eq.s32.totalorder %s14, 1
    %p84 = por %p82, %p83
    %p86 = scmp.ne.s32.totalorder %s69, %s85
    %p87 = scmp.eq.s32.totalorder %s14, 0
    %p88 = por %p86, %p87
    %p89 = scmp.le.s32.totalorder 1, %s8
    %p90 = scmp.lt.s32.totalorder %s8, 3
    %p91 = pnand %p89, %p90
    %p92 = pneg %p91
    // Predicated region
    $region9: #{tpu_custom_call.1} parent=5 // pred_check
      _
    $region10: #{tpu_custom_call.1} parent=5 // pred_check_branch
      %94 = sbr.rel (%p91) target = $region12
    $region11: #{tpu_custom_call.1} parent=5 // pred_region
      %s95 = ssub.s32 %s8, 1
      // Predicated region
      $region13: #{tpu_custom_call.1} parent=11 // pred_check
        %p96 = pneg %p55
      $region14: #{tpu_custom_call.1} parent=11 // pred_check_branch
        %98 = sbr.rel (%p96) target = $region16
      $region15: #{tpu_custom_call.1} parent=11 // pred_region
        _
      $region16: #{tpu_custom_call.1} parent=11 // pred_fallthru
        _
    $region12: #{tpu_custom_call.1} parent=5 // pred_fallthru
      _
    %p99 = scmp.lt.s32.totalorder %s8, 2
    // Predicated region
    $region17: #{tpu_custom_call.1} parent=5 // pred_check
      %p100 = pneg %p99
    $region18: #{tpu_custom_call.1} parent=5 // pred_check_branch
      %102 = sbr.rel (%p100) target = $region20
    $region19: #{tpu_custom_call.1} parent=5 // pred_region
      // Predicated region
      $region21: #{tpu_custom_call.1} parent=19 // pred_check
        %p103 = pneg %p28
      $region22: #{tpu_custom_call.1} parent=19 // pred_check_branch
        %105 = sbr.rel (%p103) target = $region24
      $region23: #{tpu_custom_call.1} parent=19 // pred_region
        %s106 = smul.u32 12, %s8
        %p107 = scmp.lt.s32.totalorder %s106, 23
        %s108 = scalar_select %p107, %s106, 23
        %s109 = smul.addr %s108, 13
        %s110 = smul.addr %s109, 4
        %s111 = scalar_lea.vmem %s0, %s110
        %s112 = smul.u32 12, %s8
      $region24: #{tpu_custom_call.1} parent=19 // pred_fallthru
        _
    $region20: #{tpu_custom_call.1} parent=5 // pred_fallthru
      _
    %p113 = scmp.le.s32.totalorder 1, %s8
    %p114 = scmp.lt.s32.totalorder %s8, 3
    %p115 = pnand %p113, %p114
    %p116 = pneg %p115
    // Predicated region
    $region25: #{tpu_custom_call.1} parent=5 // pred_check
      _
    $region26: #{tpu_custom_call.1} parent=5 // pred_check_branch
      %118 = sbr.rel (%p115) target = $region28
    $region27: #{tpu_custom_call.1} parent=5 // pred_region
      %s119 = ssub.s32 %s8, 1
      %s120 = smul.u32 12, %s13
      %p121 = scmp.lt.s32.totalorder %s120, 23
      %s122 = scalar_select %p121, %s120, 23
      %s123 = smul.addr %s122, 13
      %s124 = smul.addr %s123, 4
      %s125 = scalar_lea.vmem %s0, %s124
      %p126 = pneg %p34
      %p127 = pneg %p31
      %p128 = pneg %p55
      %p129 = pneg %p52
      %p130 = pneg %p81
      %p131 = pneg %p78
      %s132 = smul.u32 12, %s13
      %p133 = scmp.lt.s32.totalorder %s132, 23
      %s134 = scalar_select %p133, %s132, 23
      %s135 = smul.addr %s134, 8
      %s136 = scalar_lea.vmem %s2, %s135
      %s137 = smul.u32 12, %s13
      %p138 = scmp.lt.s32.totalorder %s137, 23
      %s139 = scalar_select %p138, %s137, 23
      %s140 = smul.addr %s139, 13
      %s141 = smul.addr %s140, 4
      %s142 = scalar_lea.vmem %s0, %s141
      %s143 = smul.u32 12, %s13
      %s144 = smul.u32 12, %s13
      %p145 = scmp.lt.s32.totalorder %s144, 23
      %s146 = scalar_select %p145, %s144, 23
      %s147 = smul.addr %s146, 8
      %s148 = scalar_lea.vmem %s2, %s147
      %s149 = smul.u32 12, %s13
      %v151 = vld [vmem:[%s1] sm:$0xff]
      %v152 = vld [vmem:[%s1 + $0x8] sm:$0xff]
      %v153 = vld [vmem:[%s1 + $0x10] sm:$0xff]
      %v154 = vld [vmem:[%s1 + $0x18] sm:$0xff]
      %v155 = vld [vmem:[%s1 + $0x20] sm:$0xff]
      %v156 = vld [vmem:[%s1 + $0x28] sm:$0xff]
      %v157 = vld [vmem:[%s1 + $0x30] sm:$0xff]
      %v158 = vld [vmem:[%s1 + $0x38] sm:$0xff]
      %v159 = vld [vmem:[%s1 + $0x40] sm:$0xff]
      %v160 = vld [vmem:[%s1 + $0x48] sm:$0xff]
      %v161 = vld [vmem:[%s1 + $0x50] sm:$0xff]
      %v162 = vld [vmem:[%s1 + $0x58] sm:$0xff]
      %v163 = vld [vmem:[%s1 + $0x60] sm:$0xff]
      %v164 = vld [vmem:[%s1 + $0x68] sm:$0xff]
      %v165 = vld [vmem:[%s1 + $0x70] sm:$0xff]
      %v166 = vld [vmem:[%s1 + $0x78] sm:$0xff]
      %v167 = vld [vmem:[%s1 + $0x80] sm:$0xff]
      %v168 = vld [vmem:[%s1 + $0x88] sm:$0xff]
      %v169 = vld [vmem:[%s1 + $0x90] sm:$0xff]
      %v170 = vld [vmem:[%s1 + $0x98] sm:$0xff]
      %v171 = vld [vmem:[%s1 + $0xa0] sm:$0xff]
      %v172 = vld [vmem:[%s1 + $0xa8] sm:$0xff]
      %v173 = vld [vmem:[%s1 + $0xb0] sm:$0xff]
      %v174 = vld [vmem:[%s1 + $0xb8] sm:$0xff]
      %v175 = vld [vmem:[%s1 + $0xc0] sm:$0xff]
      %v176 = vld [vmem:[%s1 + $0xc8] sm:$0xff]
      %v177 = vld [vmem:[%s1 + $0xd0] sm:$0xff]
      %v178 = vld [vmem:[%s1 + $0xd8] sm:$0xff]
      %v179 = vld [vmem:[%s1 + $0xe0] sm:$0xff]
      %v180 = vld [vmem:[%s1 + $0xe8] sm:$0xff]
      %v181 = vld [vmem:[%s1 + $0xf0] sm:$0xff]
      %v182 = vld [vmem:[%s1 + $0xf8] sm:$0xff]
      %v183 = vld [vmem:[%s1 + $0x100] sm:$0xff]
      %v184 = vld [vmem:[%s1 + $0x108] sm:$0xff]
      %v185 = vld [vmem:[%s1 + $0x110] sm:$0xff]
      %v186 = vld [vmem:[%s1 + $0x118] sm:$0xff]
      %v187 = vld [vmem:[%s1 + $0x120] sm:$0xff]
      %v188 = vld [vmem:[%s1 + $0x128] sm:$0xff]
      %v189 = vld [vmem:[%s1 + $0x130] sm:$0xff]
      %v190 = vld [vmem:[%s1 + $0x138] sm:$0xff]
      %v191 = vld [vmem:[%s1 + $0x140] sm:$0xff]
      %v192 = vld [vmem:[%s1 + $0x148] sm:$0xff]
      %v193 = vld [vmem:[%s1 + $0x150] sm:$0xff]
      %v194 = vld [vmem:[%s1 + $0x158] sm:$0xff]
      %v195 = vld [vmem:[%s1 + $0x160] sm:$0xff]
      %v196 = vld [vmem:[%s1 + $0x168] sm:$0xff]
      %v197 = vld [vmem:[%s1 + $0x170] sm:$0xff]
      %v198 = vld [vmem:[%s1 + $0x178] sm:$0xff]
      %v199 = vld [vmem:[%s1 + $0x180] sm:$0xff]
      %v200 = vld [vmem:[%s1 + $0x188] sm:$0xff]
      %v201 = vld [vmem:[%s1 + $0x190] sm:$0xff]
      %v202 = vld [vmem:[%s1 + $0x198] sm:$0xff]
      %v203 = vld [vmem:[%s1 + $0x1a0] sm:$0xff]
      %v204 = vld [vmem:[%s1 + $0x1a8] sm:$0xff]
      %v205 = vld [vmem:[%s1 + $0x1b0] sm:$0xff]
      %v206 = vld [vmem:[%s1 + $0x1b8] sm:$0xff]
      %v207 = vld [vmem:[%s1 + $0x1c0] sm:$0xff]
      %v208 = vld [vmem:[%s1 + $0x1c8] sm:$0xff]
      %v209 = vld [vmem:[%s1 + $0x1d0] sm:$0xff]
      %v210 = vld [vmem:[%s1 + $0x1d8] sm:$0xff]
      %v211 = vld [vmem:[%s1 + $0x1e0] sm:$0xff]
      %v212 = vld [vmem:[%s1 + $0x1e8] sm:$0xff]
      %v213 = vld [vmem:[%s1 + $0x1f0] sm:$0xff]
      %v214 = vld [vmem:[%s1 + $0x1f8] sm:$0xff]
      %v215 = vld [vmem:[%s1 + $0x200] sm:$0xff]
      %v216 = vld [vmem:[%s1 + $0x208] sm:$0xff]
      %v217 = vld [vmem:[%s1 + $0x210] sm:$0xff]
      %v218 = vld [vmem:[%s1 + $0x218] sm:$0xff]
      %v219 = vld [vmem:[%s1 + $0x220] sm:$0xff]
      %v220 = vld [vmem:[%s1 + $0x228] sm:$0xff]
      %v221 = vld [vmem:[%s1 + $0x230] sm:$0xff]
      %v222 = vld [vmem:[%s1 + $0x238] sm:$0xff]
      %v223 = vld [vmem:[%s1 + $0x240] sm:$0xff]
      %v224 = vld [vmem:[%s1 + $0x248] sm:$0xff]
      %v225 = vld [vmem:[%s1 + $0x250] sm:$0xff]
      %v226 = vld [vmem:[%s1 + $0x258] sm:$0xff]
      %v227 = vld [vmem:[%s1 + $0x260] sm:$0xff]
      %v228 = vld [vmem:[%s1 + $0x268] sm:$0xff]
      %v229 = vld [vmem:[%s1 + $0x270] sm:$0xff]
      %v230 = vld [vmem:[%s1 + $0x278] sm:$0xff]
      %v231 = vld [vmem:[%s1 + $0x280] sm:$0xff]
      %v232 = vld [vmem:[%s1 + $0x288] sm:$0xff]
      %v233 = vld [vmem:[%s1 + $0x290] sm:$0xff]
      %v234 = vld [vmem:[%s1 + $0x298] sm:$0xff]
      %v235 = vld [vmem:[%s1 + $0x2a0] sm:$0xff]
      %v236 = vld [vmem:[%s1 + $0x2a8] sm:$0xff]
      %v237 = vld [vmem:[%s1 + $0x2b0] sm:$0xff]
      %v238 = vld [vmem:[%s1 + $0x2b8] sm:$0xff]
      %v239 = vld [vmem:[%s1 + $0x2c0] sm:$0xff]
      %v240 = vld [vmem:[%s1 + $0x2c8] sm:$0xff]
      %v241 = vld [vmem:[%s1 + $0x2d0] sm:$0xff]
      %v242 = vld [vmem:[%s1 + $0x2d8] sm:$0xff]
      %v243 = vld [vmem:[%s1 + $0x2e0] sm:$0xff]
      %v244 = vld [vmem:[%s1 + $0x2e8] sm:$0xff]
      %v245 = vld [vmem:[%s1 + $0x2f0] sm:$0xff]
      %v246 = vld [vmem:[%s1 + $0x2f8] sm:$0xff]
      %v247 = vld [vmem:[%s1 + $0x300] sm:$0xff]
      %v248 = vld [vmem:[%s1 + $0x308] sm:$0xff]
      %v249 = vld [vmem:[%s1 + $0x310] sm:$0xff]
      %v250 = vld [vmem:[%s1 + $0x318] sm:$0xff]
      %v251 = vld [vmem:[%s1 + $0x320] sm:$0xff]
      %v252 = vld [vmem:[%s1 + $0x328] sm:$0xff]
      %v253 = vld [vmem:[%s1 + $0x330] sm:$0xff]
      %v254 = vld [vmem:[%s1 + $0x338] sm:$0xff]
      %v255 = vld [vmem:[%s1 + $0x340] sm:$0xff]
      %v256 = vld [vmem:[%s1 + $0x348] sm:$0xff]
      %v257 = vld [vmem:[%s1 + $0x350] sm:$0xff]
      %v258 = vld [vmem:[%s1 + $0x358] sm:$0xff]
      %v259 = vld [vmem:[%s1 + $0x360] sm:$0xff]
      %v260 = vld [vmem:[%s1 + $0x368] sm:$0xff]
      %v261 = vld [vmem:[%s1 + $0x370] sm:$0xff]
      %v262 = vld [vmem:[%s1 + $0x378] sm:$0xff]
      %v263 = vld [vmem:[%s1 + $0x380] sm:$0xff]
      %v264 = vld [vmem:[%s1 + $0x388] sm:$0xff]
      %v265 = vld [vmem:[%s1 + $0x390] sm:$0xff]
      %v266 = vld [vmem:[%s1 + $0x398] sm:$0xff]
      %v267 = vld [vmem:[%s1 + $0x3a0] sm:$0xff]
      %v268 = vld [vmem:[%s1 + $0x3a8] sm:$0xff]
      %v269 = vld [vmem:[%s1 + $0x3b0] sm:$0xff]
      %v270 = vld [vmem:[%s1 + $0x3b8] sm:$0xff]
      %v271 = vld [vmem:[%s1 + $0x3c0] sm:$0xff]
      %v272 = vld [vmem:[%s1 + $0x3c8] sm:$0xff]
      %v273 = vld [vmem:[%s1 + $0x3d0] sm:$0xff]
      %v274 = vld [vmem:[%s1 + $0x3d8] sm:$0xff]
      %v275 = vld [vmem:[%s1 + $0x3e0] sm:$0xff]
      %v276 = vld [vmem:[%s1 + $0x3e8] sm:$0xff]
      %v277 = vld [vmem:[%s1 + $0x3f0] sm:$0xff]
      %v278 = vld [vmem:[%s1 + $0x3f8] sm:$0xff]
      %v279 = vld [vmem:[%s1 + $0x400] sm:$0xff]
      %v280 = vld [vmem:[%s1 + $0x408] sm:$0xff]
      %v281 = vld [vmem:[%s1 + $0x410] sm:$0xff]
      %v282 = vld [vmem:[%s1 + $0x418] sm:$0xff]
      %v283 = vld [vmem:[%s1 + $0x420] sm:$0xff]
      %v284 = vld [vmem:[%s1 + $0x428] sm:$0xff]
      %v285 = vld [vmem:[%s1 + $0x430] sm:$0xff]
      %v286 = vld [vmem:[%s1 + $0x438] sm:$0xff]
      %v287 = vld [vmem:[%s1 + $0x440] sm:$0xff]
      %v288 = vld [vmem:[%s1 + $0x448] sm:$0xff]
      %v289 = vld [vmem:[%s1 + $0x450] sm:$0xff]
      %v290 = vld [vmem:[%s1 + $0x458] sm:$0xff]
      %v291 = vld [vmem:[%s1 + $0x460] sm:$0xff]
      %v292 = vld [vmem:[%s1 + $0x468] sm:$0xff]
      %v293 = vld [vmem:[%s1 + $0x470] sm:$0xff]
      %v294 = vld [vmem:[%s1 + $0x478] sm:$0xff]
      %v295 = vld [vmem:[%s1 + $0x480] sm:$0xff]
      %v296 = vld [vmem:[%s1 + $0x488] sm:$0xff]
      %v297 = vld [vmem:[%s1 + $0x490] sm:$0xff]
      %v298 = vld [vmem:[%s1 + $0x498] sm:$0xff]
      %v299 = vld [vmem:[%s1 + $0x4a0] sm:$0xff]
      %v300 = vld [vmem:[%s1 + $0x4a8] sm:$0xff]
      %v301 = vld [vmem:[%s1 + $0x4b0] sm:$0xff]
      %v302 = vld [vmem:[%s1 + $0x4b8] sm:$0xff]
      %v303 = vld [vmem:[%s1 + $0x4c0] sm:$0xff]
      %v304 = vld [vmem:[%s1 + $0x4c8] sm:$0xff]
      %v305 = vld [vmem:[%s1 + $0x4d0] sm:$0xff]
      %v306 = vld [vmem:[%s1 + $0x4d8] sm:$0xff]
      %v307 = vld [vmem:[%s1 + $0x4e0] sm:$0xff]
      %v308 = vld [vmem:[%s1 + $0x4e8] sm:$0xff]
      %v309 = vld [vmem:[%s1 + $0x4f0] sm:$0xff]
      %v310 = vld [vmem:[%s1 + $0x4f8] sm:$0xff]
      %v311 = vld [vmem:[%s1 + $0x500] sm:$0xff]
      %v312 = vld [vmem:[%s1 + $0x508] sm:$0xff]
      %v313 = vld [vmem:[%s1 + $0x510] sm:$0xff]
      %v314 = vld [vmem:[%s1 + $0x518] sm:$0xff]
      %v315 = vld [vmem:[%s1 + $0x520] sm:$0xff]
      %v316 = vld [vmem:[%s1 + $0x528] sm:$0xff]
      %v317 = vld [vmem:[%s1 + $0x530] sm:$0xff]
      %v318 = vld [vmem:[%s1 + $0x538] sm:$0xff]
      %v319 = vld [vmem:[%s1 + $0x540] sm:$0xff]
      %v320 = vld [vmem:[%s1 + $0x548] sm:$0xff]
      %v321 = vld [vmem:[%s1 + $0x550] sm:$0xff]
      %v322 = vld [vmem:[%s1 + $0x558] sm:$0xff]
      %v323 = vld [vmem:[%s1 + $0x560] sm:$0xff]
      %v324 = vld [vmem:[%s1 + $0x568] sm:$0xff]
      %v325 = vld [vmem:[%s1 + $0x570] sm:$0xff]
      %v326 = vld [vmem:[%s1 + $0x578] sm:$0xff]
      %v327 = vld [vmem:[%s1 + $0x580] sm:$0xff]
      %v328 = vld [vmem:[%s1 + $0x588] sm:$0xff]
      %v329 = vld [vmem:[%s1 + $0x590] sm:$0xff]
      %v330 = vld [vmem:[%s1 + $0x598] sm:$0xff]
      %v331 = vld [vmem:[%s1 + $0x5a0] sm:$0xff]
      %v332 = vld [vmem:[%s1 + $0x5a8] sm:$0xff]
      %v333 = vld [vmem:[%s1 + $0x5b0] sm:$0xff]
      %v334 = vld [vmem:[%s1 + $0x5b8] sm:$0xff]
      %v335 = vld [vmem:[%s1 + $0x5c0] sm:$0xff]
      %v336 = vld [vmem:[%s1 + $0x5c8] sm:$0xff]
      %v337 = vld [vmem:[%s1 + $0x5d0] sm:$0xff]
      %v338 = vld [vmem:[%s1 + $0x5d8] sm:$0xff]
      %v339 = vld [vmem:[%s1 + $0x5e0] sm:$0xff]
      %v340 = vld [vmem:[%s1 + $0x5e8] sm:$0xff]
      %v341 = vld [vmem:[%s1 + $0x5f0] sm:$0xff]
      %v342 = vld [vmem:[%s1 + $0x5f8] sm:$0xff]
      %v343 = vld [vmem:[%s1 + $0x600] sm:$0xff]
      %v344 = vld [vmem:[%s1 + $0x608] sm:$0xff]
      %v345 = vld [vmem:[%s1 + $0x610] sm:$0xff]
      %v346 = vld [vmem:[%s1 + $0x618] sm:$0xff]
      %v347 = vld [vmem:[%s1 + $0x620] sm:$0xff]
      %v348 = vld [vmem:[%s1 + $0x628] sm:$0xff]
      %v349 = vmax.f32 %v151, 0.0
      %v350 = vmax.f32 %v152, 0.0
      %v351 = vmax.f32 %v153, 0.0
      %v352 = vmax.f32 %v154, 0.0
      %v353 = vmax.f32 %v155, 0.0
      %v354 = vmax.f32 %v156, 0.0
      %v355 = vmax.f32 %v157, 0.0
      %v356 = vmax.f32 %v158, 0.0
      %v357 = vmax.f32 %v159, 0.0
      %v358 = vmax.f32 %v160, 0.0
      %v359 = vmax.f32 %v161, 0.0
      %v360 = vmax.f32 %v162, 0.0
      %v361 = vmax.f32 %v163, 0.0
      %v362 = vmax.f32 %v164, 0.0
      %v363 = vmax.f32 %v165, 0.0
      %v364 = vmax.f32 %v166, 0.0
      %v365 = vmax.f32 %v167, 0.0
      %v366 = vmax.f32 %v168, 0.0
      %v367 = vmax.f32 %v169, 0.0
      %v368 = vmax.f32 %v170, 0.0
      %v369 = vmax.f32 %v171, 0.0
      %v370 = vmax.f32 %v172, 0.0
      %v371 = vmax.f32 %v173, 0.0
      %v372 = vmax.f32 %v174, 0.0
      %v373 = vmax.f32 %v175, 0.0
      %v374 = vmax.f32 %v176, 0.0
      %v375 = vmax.f32 %v177, 0.0
      %v376 = vmax.f32 %v178, 0.0
      %v377 = vmax.f32 %v179, 0.0
      %v378 = vmax.f32 %v180, 0.0
      %v379 = vmax.f32 %v181, 0.0
      %v380 = vmax.f32 %v182, 0.0
      %v381 = vmax.f32 %v183, 0.0
      %v382 = vmax.f32 %v184, 0.0
      %v383 = vmax.f32 %v185, 0.0
      %v384 = vmax.f32 %v186, 0.0
      %v385 = vmax.f32 %v187, 0.0
      %v386 = vmax.f32 %v188, 0.0
      %v387 = vmax.f32 %v189, 0.0
      %v388 = vmax.f32 %v190, 0.0
      %v389 = vmax.f32 %v191, 0.0
      %v390 = vmax.f32 %v192, 0.0
      %v391 = vmax.f32 %v193, 0.0
      %v392 = vmax.f32 %v194, 0.0
      %v393 = vmax.f32 %v195, 0.0
      %v394 = vmax.f32 %v196, 0.0
      %v395 = vmax.f32 %v197, 0.0
      %v396 = vmax.f32 %v198, 0.0
      %v397 = vmax.f32 %v199, 0.0
      %v398 = vmax.f32 %v200, 0.0
      %v399 = vmax.f32 %v201, 0.0
      %v400 = vmax.f32 %v202, 0.0
      %v401 = vmax.f32 %v203, 0.0
      %v402 = vmax.f32 %v204, 0.0
      %v403 = vmax.f32 %v205, 0.0
      %v404 = vmax.f32 %v206, 0.0
      %v405 = vmax.f32 %v207, 0.0
      %v406 = vmax.f32 %v208, 0.0
      %v407 = vmax.f32 %v209, 0.0
      %v408 = vmax.f32 %v210, 0.0
      %v409 = vmax.f32 %v211, 0.0
      %v410 = vmax.f32 %v212, 0.0
      %v411 = vmax.f32 %v213, 0.0
      %v412 = vmax.f32 %v214, 0.0
      %v413 = vmax.f32 %v215, 0.0
      %v414 = vmax.f32 %v216, 0.0
      %v415 = vmax.f32 %v217, 0.0
      %v416 = vmax.f32 %v218, 0.0
      %v417 = vmax.f32 %v219, 0.0
      %v418 = vmax.f32 %v220, 0.0
      %v419 = vmax.f32 %v221, 0.0
      %v420 = vmax.f32 %v222, 0.0
      %v421 = vmax.f32 %v223, 0.0
      %v422 = vmax.f32 %v224, 0.0
      %v423 = vmax.f32 %v225, 0.0
      %v424 = vmax.f32 %v226, 0.0
      %v425 = vmax.f32 %v227, 0.0
      %v426 = vmax.f32 %v228, 0.0
      %v427 = vmax.f32 %v229, 0.0
      %v428 = vmax.f32 %v230, 0.0
      %v429 = vmax.f32 %v231, 0.0
      %v430 = vmax.f32 %v232, 0.0
      %v431 = vmax.f32 %v233, 0.0
      %v432 = vmax.f32 %v234, 0.0
      %v433 = vmax.f32 %v235, 0.0
      %v434 = vmax.f32 %v236, 0.0
      %v435 = vmax.f32 %v237, 0.0
      %v436 = vmax.f32 %v238, 0.0
      %v437 = vmax.f32 %v239, 0.0
      %v438 = vmax.f32 %v240, 0.0
      %v439 = vmax.f32 %v241, 0.0
      %v440 = vmax.f32 %v242, 0.0
      %v441 = vmax.f32 %v243, 0.0
      %v442 = vmax.f32 %v244, 0.0
      %v443 = vmax.f32 %v245, 0.0
      %v444 = vmax.f32 %v246, 0.0
      %v445 = vmax.f32 %v247, 0.0
      %v446 = vmax.f32 %v248, 0.0
      %v447 = vmax.f32 %v249, 0.0
      %v448 = vmax.f32 %v250, 0.0
      %v449 = vmax.f32 %v251, 0.0
      %v450 = vmax.f32 %v252, 0.0
      %v451 = vmax.f32 %v253, 0.0
      %v452 = vmax.f32 %v254, 0.0
      %v453 = vmax.f32 %v255, 0.0
      %v454 = vmax.f32 %v256, 0.0
      %v455 = vmax.f32 %v257, 0.0
      %v456 = vmax.f32 %v258, 0.0
      %v457 = vmax.f32 %v259, 0.0
      %v458 = vmax.f32 %v260, 0.0
      %v459 = vmax.f32 %v261, 0.0
      %v460 = vmax.f32 %v262, 0.0
      %v461 = vmax.f32 %v263, 0.0
      %v462 = vmax.f32 %v264, 0.0
      %v463 = vmax.f32 %v265, 0.0
      %v464 = vmax.f32 %v266, 0.0
      %v465 = vmax.f32 %v267, 0.0
      %v466 = vmax.f32 %v268, 0.0
      %v467 = vmax.f32 %v269, 0.0
      %v468 = vmax.f32 %v270, 0.0
      %v469 = vmax.f32 %v271, 0.0
      %v470 = vmax.f32 %v272, 0.0
      %v471 = vmax.f32 %v273, 0.0
      %v472 = vmax.f32 %v274, 0.0
      %v473 = vmax.f32 %v275, 0.0
      %v474 = vmax.f32 %v276, 0.0
      %v475 = vmax.f32 %v277, 0.0
      %v476 = vmax.f32 %v278, 0.0
      %v477 = vmax.f32 %v279, 0.0
      %v478 = vmax.f32 %v280, 0.0
      %v479 = vmax.f32 %v281, 0.0
      %v480 = vmax.f32 %v282, 0.0
      %v481 = vmax.f32 %v283, 0.0
      %v482 = vmax.f32 %v284, 0.0
      %v483 = vmax.f32 %v285, 0.0
      %v484 = vmax.f32 %v286, 0.0
      %v485 = vmax.f32 %v287, 0.0
      %v486 = vmax.f32 %v288, 0.0
      %v487 = vmax.f32 %v289, 0.0
      %v488 = vmax.f32 %v290, 0.0
      %v489 = vmax.f32 %v291, 0.0
      %v490 = vmax.f32 %v292, 0.0
      %v491 = vmax.f32 %v293, 0.0
      %v492 = vmax.f32 %v294, 0.0
      %v493 = vmax.f32 %v295, 0.0
      %v494 = vmax.f32 %v296, 0.0
      %v495 = vmax.f32 %v297, 0.0
      %v496 = vmax.f32 %v298, 0.0
      %v497 = vmax.f32 %v299, 0.0
      %v498 = vmax.f32 %v300, 0.0
      %v499 = vmax.f32 %v301, 0.0
      %v500 = vmax.f32 %v302, 0.0
      %v501 = vmax.f32 %v303, 0.0
      %v502 = vmax.f32 %v304, 0.0
      %v503 = vmax.f32 %v305, 0.0
      %v504 = vmax.f32 %v306, 0.0
      %v505 = vmax.f32 %v307, 0.0
      %v506 = vmax.f32 %v308, 0.0
      %v507 = vmax.f32 %v309, 0.0
      %v508 = vmax.f32 %v310, 0.0
      %v509 = vmax.f32 %v311, 0.0
      %v510 = vmax.f32 %v312, 0.0
      %v511 = vmax.f32 %v313, 0.0
      %v512 = vmax.f32 %v314, 0.0
      %v513 = vmax.f32 %v315, 0.0
      %v514 = vmax.f32 %v316, 0.0
      %v515 = vmax.f32 %v317, 0.0
      %v516 = vmax.f32 %v318, 0.0
      %v517 = vmax.f32 %v319, 0.0
      %v518 = vmax.f32 %v320, 0.0
      %v519 = vmax.f32 %v321, 0.0
      %v520 = vmax.f32 %v322, 0.0
      %v521 = vmax.f32 %v323, 0.0
      %v522 = vmax.f32 %v324, 0.0
      %v523 = vmax.f32 %v325, 0.0
      %v524 = vmax.f32 %v326, 0.0
      %v525 = vmax.f32 %v327, 0.0
      %v526 = vmax.f32 %v328, 0.0
      %v527 = vmax.f32 %v329, 0.0
      %v528 = vmax.f32 %v330, 0.0
      %v529 = vmax.f32 %v331, 0.0
      %v530 = vmax.f32 %v332, 0.0
      %v531 = vmax.f32 %v333, 0.0
      %v532 = vmax.f32 %v334, 0.0
      %v533 = vmax.f32 %v335, 0.0
      %v534 = vmax.f32 %v336, 0.0
      %v535 = vmax.f32 %v337, 0.0
      %v536 = vmax.f32 %v338, 0.0
      %v537 = vmax.f32 %v339, 0.0
      %v538 = vmax.f32 %v340, 0.0
      %v539 = vmax.f32 %v341, 0.0
      %v540 = vmax.f32 %v342, 0.0
      %v541 = vmax.f32 %v343, 0.0
      %v542 = vmax.f32 %v344, 0.0
      %v543 = vmax.f32 %v345, 0.0
      %v544 = vmax.f32 %v346, 0.0
      %v545 = vmax.f32 %v347, 0.0
      %v546 = vmax.f32 %v348, 0.0
      %v547 = vpack.c.bf16 %v350, %v349
      %v548 = vpack.c.bf16 %v352, %v351
      %v549 = vpack.c.bf16 %v354, %v353
      %v550 = vpack.c.bf16 %v356, %v355
      %v551 = vpack.c.bf16 %v358, %v357
      %v552 = vpack.c.bf16 %v360, %v359
      %v553 = vpack.c.bf16 %v362, %v361
      %v554 = vpack.c.bf16 %v364, %v363
      %v555 = vpack.c.bf16 %v366, %v365
      %v556 = vpack.c.bf16 %v368, %v367
      %v557 = vpack.c.bf16 %v370, %v369
      %v558 = vpack.c.bf16 %v372, %v371
      %v559 = vpack.c.bf16 %v374, %v373
      %v560 = vpack.c.bf16 %v376, %v375
      %v561 = vpack.c.bf16 %v378, %v377
      %v562 = vpack.c.bf16 %v380, %v379
      %v563 = vpack.c.bf16 %v382, %v381
      %v564 = vpack.c.bf16 %v384, %v383
      %v565 = vpack.c.bf16 %v386, %v385
      %v566 = vpack.c.bf16 %v388, %v387
      %v567 = vpack.c.bf16 %v390, %v389
      %v568 = vpack.c.bf16 %v392, %v391
      %v569 = vpack.c.bf16 %v394, %v393
      %v570 = vpack.c.bf16 %v396, %v395
      %v571 = vpack.c.bf16 %v398, %v397
      %v572 = vpack.c.bf16 %v400, %v399
      %v573 = vpack.c.bf16 %v402, %v401
      %v574 = vpack.c.bf16 %v404, %v403
      %v575 = vpack.c.bf16 %v406, %v405
      %v576 = vpack.c.bf16 %v408, %v407
      %v577 = vpack.c.bf16 %v410, %v409
      %v578 = vpack.c.bf16 %v412, %v411
      %v579 = vpack.c.bf16 %v414, %v413
      %v580 = vpack.c.bf16 %v416, %v415
      %v581 = vpack.c.bf16 %v418, %v417
      %v582 = vpack.c.bf16 %v420, %v419
      %v583 = vpack.c.bf16 %v422, %v421
      %v584 = vpack.c.bf16 %v424, %v423
      %v585 = vpack.c.bf16 %v426, %v425
      %v586 = vpack.c.bf16 %v428, %v427
      %v587 = vpack.c.bf16 %v430, %v429
      %v588 = vpack.c.bf16 %v432, %v431
      %v589 = vpack.c.bf16 %v434, %v433
      %v590 = vpack.c.bf16 %v436, %v435
      %v591 = vpack.c.bf16 %v438, %v437
      %v592 = vpack.c.bf16 %v440, %v439
      %v593 = vpack.c.bf16 %v442, %v441
      %v594 = vpack.c.bf16 %v444, %v443
      %v595 = vpack.c.bf16 %v446, %v445
      %v596 = vpack.c.bf16 %v448, %v447
      %v597 = vpack.c.bf16 %v450, %v449
      %v598 = vpack.c.bf16 %v452, %v451
      %v599 = vpack.c.bf16 %v454, %v453
      %v600 = vpack.c.bf16 %v456, %v455
      %v601 = vpack.c.bf16 %v458, %v457
      %v602 = vpack.c.bf16 %v460, %v459
      %v603 = vpack.c.bf16 %v462, %v461
      %v604 = vpack.c.bf16 %v464, %v463
      %v605 = vpack.c.bf16 %v466, %v465
      %v606 = vpack.c.bf16 %v468, %v467
      %v607 = vpack.c.bf16 %v470, %v469
      %v608 = vpack.c.bf16 %v472, %v471
      %v609 = vpack.c.bf16 %v474, %v473
      %v610 = vpack.c.bf16 %v476, %v475
      %v611 = vpack.c.bf16 %v478, %v477
      %v612 = vpack.c.bf16 %v480, %v479
      %v613 = vpack.c.bf16 %v482, %v481
      %v614 = vpack.c.bf16 %v484, %v483
      %v615 = vpack.c.bf16 %v486, %v485
      %v616 = vpack.c.bf16 %v488, %v487
      %v617 = vpack.c.bf16 %v490, %v489
      %v618 = vpack.c.bf16 %v492, %v491
      %v619 = vpack.c.bf16 %v494, %v493
      %v620 = vpack.c.bf16 %v496, %v495
      %v621 = vpack.c.bf16 %v498, %v497
      %v622 = vpack.c.bf16 %v500, %v499
      %v623 = vpack.c.bf16 %v502, %v501
      %v624 = vpack.c.bf16 %v504, %v503
      %v625 = vpack.c.bf16 %v506, %v505
      %v626 = vpack.c.bf16 %v508, %v507
      %v627 = vpack.c.bf16 %v510, %v509
      %v628 = vpack.c.bf16 %v512, %v511
      %v629 = vpack.c.bf16 %v514, %v513
      %v630 = vpack.c.bf16 %v516, %v515
      %v631 = vpack.c.bf16 %v518, %v517
      %v632 = vpack.c.bf16 %v520, %v519
      %v633 = vpack.c.bf16 %v522, %v521
      %v634 = vpack.c.bf16 %v524, %v523
      %v635 = vpack.c.bf16 %v526, %v525
      %v636 = vpack.c.bf16 %v528, %v527
      %v637 = vpack.c.bf16 %v530, %v529
      %v638 = vpack.c.bf16 %v532, %v531
      %v639 = vpack.c.bf16 %v534, %v533
      %v640 = vpack.c.bf16 %v536, %v535
      %v641 = vpack.c.bf16 %v538, %v537
      %v642 = vpack.c.bf16 %v540, %v539
      %v643 = vpack.c.bf16 %v542, %v541
      %v644 = vpack.c.bf16 %v544, %v543
      %v645 = vpack.c.bf16 %v546, %v545
      %v646 = vld [vmem:[%s142] sm:$0xff]
      %v647 = vld [vmem:[%s142 + $0x8] sm:$0xff]
      %v648 = vld [vmem:[%s142 + $0x10] sm:$0xff]
      %v649 = vld [vmem:[%s142 + $0x18] sm:$0xff]
      %v650 = vld [vmem:[%s142 + $0x20] sm:$0xff]
      %v651 = vld [vmem:[%s142 + $0x28] sm:$0xff]
      %v652 = vld [vmem:[%s142 + $0x30] sm:$0xf]
      %v653 = vld [vmem:[%s142 + $0x34] sm:$0xff]
      %v654 = vld [vmem:[%s142 + $0x3c] sm:$0xff]
      %v655 = vld [vmem:[%s142 + $0x44] sm:$0xff]
      %v656 = vld [vmem:[%s142 + $0x4c] sm:$0xff]
      %v657 = vld [vmem:[%s142 + $0x54] sm:$0xff]
      %v658 = vld [vmem:[%s142 + $0x5c] sm:$0xff]
      %v659 = vld [vmem:[%s142 + $0x64] sm:$0xf]
      %v660 = vld [vmem:[%s142 + $0x68] sm:$0xff]
      %v661 = vld [vmem:[%s142 + $0x70] sm:$0xff]
      %v662 = vld [vmem:[%s142 + $0x78] sm:$0xff]
      %v663 = vld [vmem:[%s142 + $0x80] sm:$0xff]
      %v664 = vld [vmem:[%s142 + $0x88] sm:$0xff]
      %v665 = vld [vmem:[%s142 + $0x90] sm:$0xff]
      %v666 = vld [vmem:[%s142 + $0x98] sm:$0xf]
      %v667 = vld [vmem:[%s142 + $0x9c] sm:$0xff]
      %v668 = vld [vmem:[%s142 + $0xa4] sm:$0xff]
      %v669 = vld [vmem:[%s142 + $0xac] sm:$0xff]
      %v670 = vld [vmem:[%s142 + $0xb4] sm:$0xff]
      %v671 = vld [vmem:[%s142 + $0xbc] sm:$0xff]
      %v672 = vld [vmem:[%s142 + $0xc4] sm:$0xff]
      %v673 = vld [vmem:[%s142 + $0xcc] sm:$0xf]
      %v674 = vld [vmem:[%s142 + $0xd0] sm:$0xff]
      %v675 = vld [vmem:[%s142 + $0xd8] sm:$0xff]
      %v676 = vld [vmem:[%s142 + $0xe0] sm:$0xff]
      %v677 = vld [vmem:[%s142 + $0xe8] sm:$0xff]
      %v678 = vld [vmem:[%s142 + $0xf0] sm:$0xff]
      %v679 = vld [vmem:[%s142 + $0xf8] sm:$0xff]
      %v680 = vld [vmem:[%s142 + $0x100] sm:$0xf]
      %v681 = vld [vmem:[%s142 + $0x104] sm:$0xff]
      %v682 = vld [vmem:[%s142 + $0x10c] sm:$0xff]
      %v683 = vld [vmem:[%s142 + $0x114] sm:$0xff]
      %v684 = vld [vmem:[%s142 + $0x11c] sm:$0xff]
      %v685 = vld [vmem:[%s142 + $0x124] sm:$0xff]
      %v686 = vld [vmem:[%s142 + $0x12c] sm:$0xff]
      %v687 = vld [vmem:[%s142 + $0x134] sm:$0xf]
      %v688 = vld [vmem:[%s142 + $0x138] sm:$0xff]
      %v689 = vld [vmem:[%s142 + $0x140] sm:$0xff]
      %v690 = vld [vmem:[%s142 + $0x148] sm:$0xff]
      %v691 = vld [vmem:[%s142 + $0x150] sm:$0xff]
      %v692 = vld [vmem:[%s142 + $0x158] sm:$0xff]
      %v693 = vld [vmem:[%s142 + $0x160] sm:$0xff]
      %v694 = vld [vmem:[%s142 + $0x168] sm:$0xf]
      %v695 = vld [vmem:[%s142 + $0x16c] sm:$0xff]
      %v696 = vld [vmem:[%s142 + $0x174] sm:$0xff]
      %v697 = vld [vmem:[%s142 + $0x17c] sm:$0xff]
      %v698 = vld [vmem:[%s142 + $0x184] sm:$0xff]
      %v699 = vld [vmem:[%s142 + $0x18c] sm:$0xff]
      %v700 = vld [vmem:[%s142 + $0x194] sm:$0xff]
      %v701 = vld [vmem:[%s142 + $0x19c] sm:$0xf]
      %v702 = vld [vmem:[%s142 + $0x1a0] sm:$0xff]
      %v703 = vld [vmem:[%s142 + $0x1a8] sm:$0xff]
      %v704 = vld [vmem:[%s142 + $0x1b0] sm:$0xff]
      %v705 = vld [vmem:[%s142 + $0x1b8] sm:$0xff]
      %v706 = vld [vmem:[%s142 + $0x1c0] sm:$0xff]
      %v707 = vld [vmem:[%s142 + $0x1c8] sm:$0xff]
      %v708 = vld [vmem:[%s142 + $0x1d0] sm:$0xf]
      %v709 = vld [vmem:[%s142 + $0x1d4] sm:$0xff]
      %v710 = vld [vmem:[%s142 + $0x1dc] sm:$0xff]
      %v711 = vld [vmem:[%s142 + $0x1e4] sm:$0xff]
      %v712 = vld [vmem:[%s142 + $0x1ec] sm:$0xff]
      %v713 = vld [vmem:[%s142 + $0x1f4] sm:$0xff]
      %v714 = vld [vmem:[%s142 + $0x1fc] sm:$0xff]
      %v715 = vld [vmem:[%s142 + $0x204] sm:$0xf]
      %v716 = vld [vmem:[%s142 + $0x208] sm:$0xff]
      %v717 = vld [vmem:[%s142 + $0x210] sm:$0xff]
      %v718 = vld [vmem:[%s142 + $0x218] sm:$0xff]
      %v719 = vld [vmem:[%s142 + $0x220] sm:$0xff]
      %v720 = vld [vmem:[%s142 + $0x228] sm:$0xff]
      %v721 = vld [vmem:[%s142 + $0x230] sm:$0xff]
      %v722 = vld [vmem:[%s142 + $0x238] sm:$0xf]
      %v723 = vld [vmem:[%s142 + $0x23c] sm:$0xff]
      %v724 = vld [vmem:[%s142 + $0x244] sm:$0xff]
      %v725 = vld [vmem:[%s142 + $0x24c] sm:$0xff]
      %v726 = vld [vmem:[%s142 + $0x254] sm:$0xff]
      %v727 = vld [vmem:[%s142 + $0x25c] sm:$0xff]
      %v728 = vld [vmem:[%s142 + $0x264] sm:$0xff]
      %v729 = vld [vmem:[%s142 + $0x26c] sm:$0xf]
      %v814 = vunpack.c.l.b16 %v646
      %v815 = vunpack.c.h.b16 %v646
      %v816 = vunpack.c.l.b16 %v647
      %v817 = vunpack.c.h.b16 %v647
      %v818 = vunpack.c.l.b16 %v648
      %v819 = vunpack.c.h.b16 %v648
      %v820 = vunpack.c.l.b16 %v649
      %v821 = vunpack.c.h.b16 %v649
      %v822 = vunpack.c.l.b16 %v650
      %v823 = vunpack.c.h.b16 %v650
      %v824 = vunpack.c.l.b16 %v651
      %v825 = vunpack.c.h.b16 %v651
      %v826 = vunpack.c.l.b16 %v652
      %v827 = vunpack.c.l.b16 %v653
      %v828 = vunpack.c.h.b16 %v653
      %v829 = vunpack.c.l.b16 %v654
      %v830 = vunpack.c.h.b16 %v654
      %v831 = vunpack.c.l.b16 %v655
      %v832 = vunpack.c.h.b16 %v655
      %v833 = vunpack.c.l.b16 %v656
      %v834 = vunpack.c.h.b16 %v656
      %v835 = vunpack.c.l.b16 %v657
      %v836 = vunpack.c.h.b16 %v657
      %v837 = vunpack.c.l.b16 %v658
      %v838 = vunpack.c.h.b16 %v658
      %v839 = vunpack.c.l.b16 %v659
      %v840 = vunpack.c.l.b16 %v660
      %v841 = vunpack.c.h.b16 %v660
      %v842 = vunpack.c.l.b16 %v661
      %v843 = vunpack.c.h.b16 %v661
      %v844 = vunpack.c.l.b16 %v662
      %v845 = vunpack.c.h.b16 %v662
      %v846 = vunpack.c.l.b16 %v663
      %v847 = vunpack.c.h.b16 %v663
      %v848 = vunpack.c.l.b16 %v664
      %v849 = vunpack.c.h.b16 %v664
      %v850 = vunpack.c.l.b16 %v665
      %v851 = vunpack.c.h.b16 %v665
      %v852 = vunpack.c.l.b16 %v666
      %v853 = vunpack.c.l.b16 %v667
      %v854 = vunpack.c.h.b16 %v667
      %v855 = vunpack.c.l.b16 %v668
      %v856 = vunpack.c.h.b16 %v668
      %v857 = vunpack.c.l.b16 %v669
      %v858 = vunpack.c.h.b16 %v669
      %v859 = vunpack.c.l.b16 %v670
      %v860 = vunpack.c.h.b16 %v670
      %v861 = vunpack.c.l.b16 %v671
      %v862 = vunpack.c.h.b16 %v671
      %v863 = vunpack.c.l.b16 %v672
      %v864 = vunpack.c.h.b16 %v672
      %v865 = vunpack.c.l.b16 %v673
      %v866 = vunpack.c.l.b16 %v674
      %v867 = vunpack.c.h.b16 %v674
      %v868 = vunpack.c.l.b16 %v675
      %v869 = vunpack.c.h.b16 %v675
      %v870 = vunpack.c.l.b16 %v676
      %v871 = vunpack.c.h.b16 %v676
      %v872 = vunpack.c.l.b16 %v677
      %v873 = vunpack.c.h.b16 %v677
      %v874 = vunpack.c.l.b16 %v678
      %v875 = vunpack.c.h.b16 %v678
      %v876 = vunpack.c.l.b16 %v679
      %v877 = vunpack.c.h.b16 %v679
      %v878 = vunpack.c.l.b16 %v680
      %v879 = vunpack.c.l.b16 %v681
      %v880 = vunpack.c.h.b16 %v681
      %v881 = vunpack.c.l.b16 %v682
      %v882 = vunpack.c.h.b16 %v682
      %v883 = vunpack.c.l.b16 %v683
      %v884 = vunpack.c.h.b16 %v683
      %v885 = vunpack.c.l.b16 %v684
      %v886 = vunpack.c.h.b16 %v684
      %v887 = vunpack.c.l.b16 %v685
      %v888 = vunpack.c.h.b16 %v685
      %v889 = vunpack.c.l.b16 %v686
      %v890 = vunpack.c.h.b16 %v686
      %v891 = vunpack.c.l.b16 %v687
      %v892 = vunpack.c.l.b16 %v688
      %v893 = vunpack.c.h.b16 %v688
      %v894 = vunpack.c.l.b16 %v689
      %v895 = vunpack.c.h.b16 %v689
      %v896 = vunpack.c.l.b16 %v690
      %v897 = vunpack.c.h.b16 %v690
      %v898 = vunpack.c.l.b16 %v691
      %v899 = vunpack.c.h.b16 %v691
      %v900 = vunpack.c.l.b16 %v692
      %v901 = vunpack.c.h.b16 %v692
      %v902 = vunpack.c.l.b16 %v693
      %v903 = vunpack.c.h.b16 %v693
      %v904 = vunpack.c.l.b16 %v694
      %v905 = vunpack.c.l.b16 %v695
      %v906 = vunpack.c.h.b16 %v695
      %v907 = vunpack.c.l.b16 %v696
      %v908 = vunpack.c.h.b16 %v696
      %v909 = vunpack.c.l.b16 %v697
      %v910 = vunpack.c.h.b16 %v697
      %v911 = vunpack.c.l.b16 %v698
      %v912 = vunpack.c.h.b16 %v698
      %v913 = vunpack.c.l.b16 %v699
      %v914 = vunpack.c.h.b16 %v699
      %v915 = vunpack.c.l.b16 %v700
      %v916 = vunpack.c.h.b16 %v700
      %v917 = vunpack.c.l.b16 %v701
      %v918 = vunpack.c.l.b16 %v702
      %v919 = vunpack.c.h.b16 %v702
      %v920 = vunpack.c.l.b16 %v703
      %v921 = vunpack.c.h.b16 %v703
      %v922 = vunpack.c.l.b16 %v704
      %v923 = vunpack.c.h.b16 %v704
      %v924 = vunpack.c.l.b16 %v705
      %v925 = vunpack.c.h.b16 %v705
      %v926 = vunpack.c.l.b16 %v706
      %v927 = vunpack.c.h.b16 %v706
      %v928 = vunpack.c.l.b16 %v707
      %v929 = vunpack.c.h.b16 %v707
      %v930 = vunpack.c.l.b16 %v708
      %v931 = vunpack.c.l.b16 %v709
      %v932 = vunpack.c.h.b16 %v709
      %v933 = vunpack.c.l.b16 %v710
      %v934 = vunpack.c.h.b16 %v710
      %v935 = vunpack.c.l.b16 %v711
      %v936 = vunpack.c.h.b16 %v711
      %v937 = vunpack.c.l.b16 %v712
      %v938 = vunpack.c.h.b16 %v712
      %v939 = vunpack.c.l.b16 %v713
      %v940 = vunpack.c.h.b16 %v713
      %v941 = vunpack.c.l.b16 %v714
      %v942 = vunpack.c.h.b16 %v714
      %v943 = vunpack.c.l.b16 %v715
      %v944 = vunpack.c.l.b16 %v716
      %v945 = vunpack.c.h.b16 %v716
      %v946 = vunpack.c.l.b16 %v717
      %v947 = vunpack.c.h.b16 %v717
      %v948 = vunpack.c.l.b16 %v718
      %v949 = vunpack.c.h.b16 %v718
      %v950 = vunpack.c.l.b16 %v719
      %v951 = vunpack.c.h.b16 %v719
      %v952 = vunpack.c.l.b16 %v720
      %v953 = vunpack.c.h.b16 %v720
      %v954 = vunpack.c.l.b16 %v721
      %v955 = vunpack.c.h.b16 %v721
      %v956 = vunpack.c.l.b16 %v722
      %v957 = vunpack.c.l.b16 %v723
      %v958 = vunpack.c.h.b16 %v723
      %v959 = vunpack.c.l.b16 %v724
      %v960 = vunpack.c.h.b16 %v724
      %v961 = vunpack.c.l.b16 %v725
      %v962 = vunpack.c.h.b16 %v725
      %v963 = vunpack.c.l.b16 %v726
      %v964 = vunpack.c.h.b16 %v726
      %v965 = vunpack.c.l.b16 %v727
      %v966 = vunpack.c.h.b16 %v727
      %v967 = vunpack.c.l.b16 %v728
      %v968 = vunpack.c.h.b16 %v728
      %v969 = vunpack.c.l.b16 %v729
      %v970 = vpack.c.b16 %v827, %v814
      %v971 = vpack.c.b16 %v828, %v815
      %v972 = vpack.c.b16 %v829, %v816
      %v973 = vpack.c.b16 %v830, %v817
      %v974 = vpack.c.b16 %v831, %v818
      %v975 = vpack.c.b16 %v832, %v819
      %v976 = vpack.c.b16 %v833, %v820
      %v977 = vpack.c.b16 %v834, %v821
      %v978 = vpack.c.b16 %v835, %v822
      %v979 = vpack.c.b16 %v836, %v823
      %v980 = vpack.c.b16 %v837, %v824
      %v981 = vpack.c.b16 %v838, %v825
      %v982 = vpack.c.b16 %v839, %v826
      %v983 = vpack.c.b16 %v853, %v840
      %v984 = vpack.c.b16 %v854, %v841
      %v985 = vpack.c.b16 %v855, %v842
      %v986 = vpack.c.b16 %v856, %v843
      %v987 = vpack.c.b16 %v857, %v844
      %v988 = vpack.c.b16 %v858, %v845
      %v989 = vpack.c.b16 %v859, %v846
      %v990 = vpack.c.b16 %v860, %v847
      %v991 = vpack.c.b16 %v861, %v848
      %v992 = vpack.c.b16 %v862, %v849
      %v993 = vpack.c.b16 %v863, %v850
      %v994 = vpack.c.b16 %v864, %v851
      %v995 = vpack.c.b16 %v865, %v852
      %v996 = vpack.c.b16 %v879, %v866
      %v997 = vpack.c.b16 %v880, %v867
      %v998 = vpack.c.b16 %v881, %v868
      %v999 = vpack.c.b16 %v882, %v869
      %v1000 = vpack.c.b16 %v883, %v870
      %v1001 = vpack.c.b16 %v884, %v871
      %v1002 = vpack.c.b16 %v885, %v872
      %v1003 = vpack.c.b16 %v886, %v873
      %v1004 = vpack.c.b16 %v887, %v874
      %v1005 = vpack.c.b16 %v888, %v875
      %v1006 = vpack.c.b16 %v889, %v876
      %v1007 = vpack.c.b16 %v890, %v877
      %v1008 = vpack.c.b16 %v891, %v878
      %v1009 = vpack.c.b16 %v905, %v892
      %v1010 = vpack.c.b16 %v906, %v893
      %v1011 = vpack.c.b16 %v907, %v894
      %v1012 = vpack.c.b16 %v908, %v895
      %v1013 = vpack.c.b16 %v909, %v896
      %v1014 = vpack.c.b16 %v910, %v897
      %v1015 = vpack.c.b16 %v911, %v898
      %v1016 = vpack.c.b16 %v912, %v899
      %v1017 = vpack.c.b16 %v913, %v900
      %v1018 = vpack.c.b16 %v914, %v901
      %v1019 = vpack.c.b16 %v915, %v902
      %v1020 = vpack.c.b16 %v916, %v903
      %v1021 = vpack.c.b16 %v917, %v904
      %v1022 = vpack.c.b16 %v931, %v918
      %v1023 = vpack.c.b16 %v932, %v919
      %v1024 = vpack.c.b16 %v933, %v920
      %v1025 = vpack.c.b16 %v934, %v921
      %v1026 = vpack.c.b16 %v935, %v922
      %v1027 = vpack.c.b16 %v936, %v923
      %v1028 = vpack.c.b16 %v937, %v924
      %v1029 = vpack.c.b16 %v938, %v925
      %v1030 = vpack.c.b16 %v939, %v926
      %v1031 = vpack.c.b16 %v940, %v927
      %v1032 = vpack.c.b16 %v941, %v928
      %v1033 = vpack.c.b16 %v942, %v929
      %v1034 = vpack.c.b16 %v943, %v930
      %v1035 = vpack.c.b16 %v957, %v944
      %v1036 = vpack.c.b16 %v958, %v945
      %v1037 = vpack.c.b16 %v959, %v946
      %v1038 = vpack.c.b16 %v960, %v947
      %v1039 = vpack.c.b16 %v961, %v948
      %v1040 = vpack.c.b16 %v962, %v949
      %v1041 = vpack.c.b16 %v963, %v950
      %v1042 = vpack.c.b16 %v964, %v951
      %v1043 = vpack.c.b16 %v965, %v952
      %v1044 = vpack.c.b16 %v966, %v953
      %v1045 = vpack.c.b16 %v967, %v954
      %v1046 = vpack.c.b16 %v968, %v955
      %v1047 = vpack.c.b16 %v969, %v956
      %vm1120 = vcmask 392192
      %v1122 = vsel %vm1120, %v982, 0
      %v1125 = vsel %vm1120, %v995, 0
      %v1128 = vsel %vm1120, %v1008, 0
      %v1131 = vsel %vm1120, %v1021, 0
      %v1134 = vsel %vm1120, %v1034, 0
      %v1137 = vsel %vm1120, %v1047, 0
      %1139 = vmatpush.bf16.msra.mxu0 %v554
      %1140 = vmatpush.bf16.msra.mxu0 %v553
      %1141 = vmatpush.bf16.msra.mxu0 %v552
      %1142 = vmatpush.bf16.msra.mxu0 %v551
      %1143 = vmatpush.bf16.msra.mxu0 %v550
      %1144 = vmatpush.bf16.msra.mxu0 %v549
      %1145 = vmatpush.bf16.msra.mxu0 %v548
      %1146 = vmatpush.bf16.msra.mxu0 %v547
      %1147 = vmatmul.bf16.gmra.mxu0 %v970
      %v1148 = vpop.f32.mrf.mxu0
      %v1149 = vadd.f32 0.0, %v1148
      %v1150 = vpop.f32.mrf.mxu0
      %v1151 = vadd.f32 0.0, %v1150
      %1152 = vmatmul.bf16.gmra.mxu0 %v983
      %v1153 = vpop.f32.mrf.mxu0
      %v1154 = vadd.f32 0.0, %v1153
      %v1155 = vpop.f32.mrf.mxu0
      %v1156 = vadd.f32 0.0, %v1155
      %1157 = vmatmul.bf16.gmra.mxu0 %v996
      %v1158 = vpop.f32.mrf.mxu0
      %v1159 = vadd.f32 0.0, %v1158
      %v1160 = vpop.f32.mrf.mxu0
      %v1161 = vadd.f32 0.0, %v1160
      %1162 = vmatmul.bf16.gmra.mxu0 %v1009
      %v1163 = vpop.f32.mrf.mxu0
      %v1164 = vadd.f32 0.0, %v1163
      %v1165 = vpop.f32.mrf.mxu0
      %v1166 = vadd.f32 0.0, %v1165
      %1167 = vmatmul.bf16.gmra.mxu0 %v1022
      %v1168 = vpop.f32.mrf.mxu0
      %v1169 = vadd.f32 0.0, %v1168
      %v1170 = vpop.f32.mrf.mxu0
      %v1171 = vadd.f32 0.0, %v1170
      %1172 = vmatmul.bf16.gmra.mxu0 %v1035
      %v1173 = vpop.f32.mrf.mxu0
      %v1174 = vadd.f32 0.0, %v1173
      %v1175 = vpop.f32.mrf.mxu0
      %v1176 = vadd.f32 0.0, %v1175
      %1177 = vdwg.mxu0
      %1178 = vmatpush.bf16.msra.mxu0 %v562
      %1179 = vmatpush.bf16.msra.mxu0 %v561
      %1180 = vmatpush.bf16.msra.mxu0 %v560
      %1181 = vmatpush.bf16.msra.mxu0 %v559
      %1182 = vmatpush.bf16.msra.mxu0 %v558
      %1183 = vmatpush.bf16.msra.mxu0 %v557
      %1184 = vmatpush.bf16.msra.mxu0 %v556
      %1185 = vmatpush.bf16.msra.mxu0 %v555
      %1186 = vmatmul.bf16.gmra.mxu0 %v971
      %v1187 = vpop.f32.mrf.mxu0
      %v1188 = vadd.f32 %v1149, %v1187
      %v1189 = vpop.f32.mrf.mxu0
      %v1190 = vadd.f32 %v1151, %v1189
      %1191 = vmatmul.bf16.gmra.mxu0 %v984
      %v1192 = vpop.f32.mrf.mxu0
      %v1193 = vadd.f32 %v1154, %v1192
      %v1194 = vpop.f32.mrf.mxu0
      %v1195 = vadd.f32 %v1156, %v1194
      %1196 = vmatmul.bf16.gmra.mxu0 %v997
      %v1197 = vpop.f32.mrf.mxu0
      %v1198 = vadd.f32 %v1159, %v1197
      %v1199 = vpop.f32.mrf.mxu0
      %v1200 = vadd.f32 %v1161, %v1199
      %1201 = vmatmul.bf16.gmra.mxu0 %v1010
      %v1202 = vpop.f32.mrf.mxu0
      %v1203 = vadd.f32 %v1164, %v1202
      %v1204 = vpop.f32.mrf.mxu0
      %v1205 = vadd.f32 %v1166, %v1204
      %1206 = vmatmul.bf16.gmra.mxu0 %v1023
      %v1207 = vpop.f32.mrf.mxu0
      %v1208 = vadd.f32 %v1169, %v1207
      %v1209 = vpop.f32.mrf.mxu0
      %v1210 = vadd.f32 %v1171, %v1209
      %1211 = vmatmul.bf16.gmra.mxu0 %v1036
      %v1212 = vpop.f32.mrf.mxu0
      %v1213 = vadd.f32 %v1174, %v1212
      %v1214 = vpop.f32.mrf.mxu0
      %v1215 = vadd.f32 %v1176, %v1214
      %1216 = vdwg.mxu0
      %1217 = vmatpush.bf16.msra.mxu0 %v570
      %1218 = vmatpush.bf16.msra.mxu0 %v569
      %1219 = vmatpush.bf16.msra.mxu0 %v568
      %1220 = vmatpush.bf16.msra.mxu0 %v567
      %1221 = vmatpush.bf16.msra.mxu0 %v566
      %1222 = vmatpush.bf16.msra.mxu0 %v565
      %1223 = vmatpush.bf16.msra.mxu0 %v564
      %1224 = vmatpush.bf16.msra.mxu0 %v563
      %1225 = vmatmul.bf16.gmra.mxu0 %v972
      %v1226 = vpop.f32.mrf.mxu0
      %v1227 = vadd.f32 %v1188, %v1226
      %v1228 = vpop.f32.mrf.mxu0
      %v1229 = vadd.f32 %v1190, %v1228
      %1230 = vmatmul.bf16.gmra.mxu0 %v985
      %v1231 = vpop.f32.mrf.mxu0
      %v1232 = vadd.f32 %v1193, %v1231
      %v1233 = vpop.f32.mrf.mxu0
      %v1234 = vadd.f32 %v1195, %v1233
      %1235 = vmatmul.bf16.gmra.mxu0 %v998
      %v1236 = vpop.f32.mrf.mxu0
      %v1237 = vadd.f32 %v1198, %v1236
      %v1238 = vpop.f32.mrf.mxu0
      %v1239 = vadd.f32 %v1200, %v1238
      %1240 = vmatmul.bf16.gmra.mxu0 %v1011
      %v1241 = vpop.f32.mrf.mxu0
      %v1242 = vadd.f32 %v1203, %v1241
      %v1243 = vpop.f32.mrf.mxu0
      %v1244 = vadd.f32 %v1205, %v1243
      %1245 = vmatmul.bf16.gmra.mxu0 %v1024
      %v1246 = vpop.f32.mrf.mxu0
      %v1247 = vadd.f32 %v1208, %v1246
      %v1248 = vpop.f32.mrf.mxu0
      %v1249 = vadd.f32 %v1210, %v1248
      %1250 = vmatmul.bf16.gmra.mxu0 %v1037
      %v1251 = vpop.f32.mrf.mxu0
      %v1252 = vadd.f32 %v1213, %v1251
      %v1253 = vpop.f32.mrf.mxu0
      %v1254 = vadd.f32 %v1215, %v1253
      %1255 = vdwg.mxu0
      %1256 = vmatpush.bf16.msra.mxu0 %v578
      %1257 = vmatpush.bf16.msra.mxu0 %v577
      %1258 = vmatpush.bf16.msra.mxu0 %v576
      %1259 = vmatpush.bf16.msra.mxu0 %v575
      %1260 = vmatpush.bf16.msra.mxu0 %v574
      %1261 = vmatpush.bf16.msra.mxu0 %v573
      %1262 = vmatpush.bf16.msra.mxu0 %v572
      %1263 = vmatpush.bf16.msra.mxu0 %v571
      %1264 = vmatmul.bf16.gmra.mxu0 %v973
      %v1265 = vpop.f32.mrf.mxu0
      %v1266 = vadd.f32 %v1227, %v1265
      %v1267 = vpop.f32.mrf.mxu0
      %v1268 = vadd.f32 %v1229, %v1267
      %1269 = vmatmul.bf16.gmra.mxu0 %v986
      %v1270 = vpop.f32.mrf.mxu0
      %v1271 = vadd.f32 %v1232, %v1270
      %v1272 = vpop.f32.mrf.mxu0
      %v1273 = vadd.f32 %v1234, %v1272
      %1274 = vmatmul.bf16.gmra.mxu0 %v999
      %v1275 = vpop.f32.mrf.mxu0
      %v1276 = vadd.f32 %v1237, %v1275
      %v1277 = vpop.f32.mrf.mxu0
      %v1278 = vadd.f32 %v1239, %v1277
      %1279 = vmatmul.bf16.gmra.mxu0 %v1012
      %v1280 = vpop.f32.mrf.mxu0
      %v1281 = vadd.f32 %v1242, %v1280
      %v1282 = vpop.f32.mrf.mxu0
      %v1283 = vadd.f32 %v1244, %v1282
      %1284 = vmatmul.bf16.gmra.mxu0 %v1025
      %v1285 = vpop.f32.mrf.mxu0
      %v1286 = vadd.f32 %v1247, %v1285
      %v1287 = vpop.f32.mrf.mxu0
      %v1288 = vadd.f32 %v1249, %v1287
      %1289 = vmatmul.bf16.gmra.mxu0 %v1038
      %v1290 = vpop.f32.mrf.mxu0
      %v1291 = vadd.f32 %v1252, %v1290
      %v1292 = vpop.f32.mrf.mxu0
      %v1293 = vadd.f32 %v1254, %v1292
      %1294 = vdwg.mxu0
      %1295 = vmatpush.bf16.msra.mxu0 %v586
      %1296 = vmatpush.bf16.msra.mxu0 %v585
      %1297 = vmatpush.bf16.msra.mxu0 %v584
      %1298 = vmatpush.bf16.msra.mxu0 %v583
      %1299 = vmatpush.bf16.msra.mxu0 %v582
      %1300 = vmatpush.bf16.msra.mxu0 %v581
      %1301 = vmatpush.bf16.msra.mxu0 %v580
      %1302 = vmatpush.bf16.msra.mxu0 %v579
      %1303 = vmatmul.bf16.gmra.mxu0 %v974
      %v1304 = vpop.f32.mrf.mxu0
      %v1305 = vadd.f32 %v1266, %v1304
      %v1306 = vpop.f32.mrf.mxu0
      %v1307 = vadd.f32 %v1268, %v1306
      %1308 = vmatmul.bf16.gmra.mxu0 %v987
      %v1309 = vpop.f32.mrf.mxu0
      %v1310 = vadd.f32 %v1271, %v1309
      %v1311 = vpop.f32.mrf.mxu0
      %v1312 = vadd.f32 %v1273, %v1311
      %1313 = vmatmul.bf16.gmra.mxu0 %v1000
      %v1314 = vpop.f32.mrf.mxu0
      %v1315 = vadd.f32 %v1276, %v1314
      %v1316 = vpop.f32.mrf.mxu0
      %v1317 = vadd.f32 %v1278, %v1316
      %1318 = vmatmul.bf16.gmra.mxu0 %v1013
      %v1319 = vpop.f32.mrf.mxu0
      %v1320 = vadd.f32 %v1281, %v1319
      %v1321 = vpop.f32.mrf.mxu0
      %v1322 = vadd.f32 %v1283, %v1321
      %1323 = vmatmul.bf16.gmra.mxu0 %v1026
      %v1324 = vpop.f32.mrf.mxu0
      %v1325 = vadd.f32 %v1286, %v1324
      %v1326 = vpop.f32.mrf.mxu0
      %v1327 = vadd.f32 %v1288, %v1326
      %1328 = vmatmul.bf16.gmra.mxu0 %v1039
      %v1329 = vpop.f32.mrf.mxu0
      %v1330 = vadd.f32 %v1291, %v1329
      %v1331 = vpop.f32.mrf.mxu0
      %v1332 = vadd.f32 %v1293, %v1331
      %1333 = vdwg.mxu0
      %1334 = vmatpush.bf16.msra.mxu0 %v594
      %1335 = vmatpush.bf16.msra.mxu0 %v593
      %1336 = vmatpush.bf16.msra.mxu0 %v592
      %1337 = vmatpush.bf16.msra.mxu0 %v591
      %1338 = vmatpush.bf16.msra.mxu0 %v590
      %1339 = vmatpush.bf16.msra.mxu0 %v589
      %1340 = vmatpush.bf16.msra.mxu0 %v588
      %1341 = vmatpush.bf16.msra.mxu0 %v587
      %1342 = vmatmul.bf16.gmra.mxu0 %v975
      %v1343 = vpop.f32.mrf.mxu0
      %v1344 = vadd.f32 %v1305, %v1343
      %v1345 = vpop.f32.mrf.mxu0
      %v1346 = vadd.f32 %v1307, %v1345
      %1347 = vmatmul.bf16.gmra.mxu0 %v988
      %v1348 = vpop.f32.mrf.mxu0
      %v1349 = vadd.f32 %v1310, %v1348
      %v1350 = vpop.f32.mrf.mxu0
      %v1351 = vadd.f32 %v1312, %v1350
      %1352 = vmatmul.bf16.gmra.mxu0 %v1001
      %v1353 = vpop.f32.mrf.mxu0
      %v1354 = vadd.f32 %v1315, %v1353
      %v1355 = vpop.f32.mrf.mxu0
      %v1356 = vadd.f32 %v1317, %v1355
      %1357 = vmatmul.bf16.gmra.mxu0 %v1014
      %v1358 = vpop.f32.mrf.mxu0
      %v1359 = vadd.f32 %v1320, %v1358
      %v1360 = vpop.f32.mrf.mxu0
      %v1361 = vadd.f32 %v1322, %v1360
      %1362 = vmatmul.bf16.gmra.mxu0 %v1027
      %v1363 = vpop.f32.mrf.mxu0
      %v1364 = vadd.f32 %v1325, %v1363
      %v1365 = vpop.f32.mrf.mxu0
      %v1366 = vadd.f32 %v1327, %v1365
      %1367 = vmatmul.bf16.gmra.mxu0 %v1040
      %v1368 = vpop.f32.mrf.mxu0
      %v1369 = vadd.f32 %v1330, %v1368
      %v1370 = vpop.f32.mrf.mxu0
      %v1371 = vadd.f32 %v1332, %v1370
      %1372 = vdwg.mxu0
      %1373 = vmatpush.bf16.msra.mxu0 %v602
      %1374 = vmatpush.bf16.msra.mxu0 %v601
      %1375 = vmatpush.bf16.msra.mxu0 %v600
      %1376 = vmatpush.bf16.msra.mxu0 %v599
      %1377 = vmatpush.bf16.msra.mxu0 %v598
      %1378 = vmatpush.bf16.msra.mxu0 %v597
      %1379 = vmatpush.bf16.msra.mxu0 %v596
      %1380 = vmatpush.bf16.msra.mxu0 %v595
      %1381 = vmatmul.bf16.gmra.mxu0 %v976
      %v1382 = vpop.f32.mrf.mxu0
      %v1383 = vadd.f32 %v1344, %v1382
      %v1384 = vpop.f32.mrf.mxu0
      %v1385 = vadd.f32 %v1346, %v1384
      %1386 = vmatmul.bf16.gmra.mxu0 %v989
      %v1387 = vpop.f32.mrf.mxu0
      %v1388 = vadd.f32 %v1349, %v1387
      %v1389 = vpop.f32.mrf.mxu0
      %v1390 = vadd.f32 %v1351, %v1389
      %1391 = vmatmul.bf16.gmra.mxu0 %v1002
      %v1392 = vpop.f32.mrf.mxu0
      %v1393 = vadd.f32 %v1354, %v1392
      %v1394 = vpop.f32.mrf.mxu0
      %v1395 = vadd.f32 %v1356, %v1394
      %1396 = vmatmul.bf16.gmra.mxu0 %v1015
      %v1397 = vpop.f32.mrf.mxu0
      %v1398 = vadd.f32 %v1359, %v1397
      %v1399 = vpop.f32.mrf.mxu0
      %v1400 = vadd.f32 %v1361, %v1399
      %1401 = vmatmul.bf16.gmra.mxu0 %v1028
      %v1402 = vpop.f32.mrf.mxu0
      %v1403 = vadd.f32 %v1364, %v1402
      %v1404 = vpop.f32.mrf.mxu0
      %v1405 = vadd.f32 %v1366, %v1404
      %1406 = vmatmul.bf16.gmra.mxu0 %v1041
      %v1407 = vpop.f32.mrf.mxu0
      %v1408 = vadd.f32 %v1369, %v1407
      %v1409 = vpop.f32.mrf.mxu0
      %v1410 = vadd.f32 %v1371, %v1409
      %1411 = vdwg.mxu0
      %1412 = vmatpush.bf16.msra.mxu0 %v610
      %1413 = vmatpush.bf16.msra.mxu0 %v609
      %1414 = vmatpush.bf16.msra.mxu0 %v608
      %1415 = vmatpush.bf16.msra.mxu0 %v607
      %1416 = vmatpush.bf16.msra.mxu0 %v606
      %1417 = vmatpush.bf16.msra.mxu0 %v605
      %1418 = vmatpush.bf16.msra.mxu0 %v604
      %1419 = vmatpush.bf16.msra.mxu0 %v603
      %1420 = vmatmul.bf16.gmra.mxu0 %v977
      %v1421 = vpop.f32.mrf.mxu0
      %v1422 = vadd.f32 %v1383, %v1421
      %v1423 = vpop.f32.mrf.mxu0
      %v1424 = vadd.f32 %v1385, %v1423
      %1425 = vmatmul.bf16.gmra.mxu0 %v990
      %v1426 = vpop.f32.mrf.mxu0
      %v1427 = vadd.f32 %v1388, %v1426
      %v1428 = vpop.f32.mrf.mxu0
      %v1429 = vadd.f32 %v1390, %v1428
      %1430 = vmatmul.bf16.gmra.mxu0 %v1003
      %v1431 = vpop.f32.mrf.mxu0
      %v1432 = vadd.f32 %v1393, %v1431
      %v1433 = vpop.f32.mrf.mxu0
      %v1434 = vadd.f32 %v1395, %v1433
      %1435 = vmatmul.bf16.gmra.mxu0 %v1016
      %v1436 = vpop.f32.mrf.mxu0
      %v1437 = vadd.f32 %v1398, %v1436
      %v1438 = vpop.f32.mrf.mxu0
      %v1439 = vadd.f32 %v1400, %v1438
      %1440 = vmatmul.bf16.gmra.mxu0 %v1029
      %v1441 = vpop.f32.mrf.mxu0
      %v1442 = vadd.f32 %v1403, %v1441
      %v1443 = vpop.f32.mrf.mxu0
      %v1444 = vadd.f32 %v1405, %v1443
      %1445 = vmatmul.bf16.gmra.mxu0 %v1042
      %v1446 = vpop.f32.mrf.mxu0
      %v1447 = vadd.f32 %v1408, %v1446
      %v1448 = vpop.f32.mrf.mxu0
      %v1449 = vadd.f32 %v1410, %v1448
      %1450 = vdwg.mxu0
      %1451 = vmatpush.bf16.msra.mxu0 %v618
      %1452 = vmatpush.bf16.msra.mxu0 %v617
      %1453 = vmatpush.bf16.msra.mxu0 %v616
      %1454 = vmatpush.bf16.msra.mxu0 %v615
      %1455 = vmatpush.bf16.msra.mxu0 %v614
      %1456 = vmatpush.bf16.msra.mxu0 %v613
      %1457 = vmatpush.bf16.msra.mxu0 %v612
      %1458 = vmatpush.bf16.msra.mxu0 %v611
      %1459 = vmatmul.bf16.gmra.mxu0 %v978
      %v1460 = vpop.f32.mrf.mxu0
      %v1461 = vadd.f32 %v1422, %v1460
      %v1462 = vpop.f32.mrf.mxu0
      %v1463 = vadd.f32 %v1424, %v1462
      %1464 = vmatmul.bf16.gmra.mxu0 %v991
      %v1465 = vpop.f32.mrf.mxu0
      %v1466 = vadd.f32 %v1427, %v1465
      %v1467 = vpop.f32.mrf.mxu0
      %v1468 = vadd.f32 %v1429, %v1467
      %1469 = vmatmul.bf16.gmra.mxu0 %v1004
      %v1470 = vpop.f32.mrf.mxu0
      %v1471 = vadd.f32 %v1432, %v1470
      %v1472 = vpop.f32.mrf.mxu0
      %v1473 = vadd.f32 %v1434, %v1472
      %1474 = vmatmul.bf16.gmra.mxu0 %v1017
      %v1475 = vpop.f32.mrf.mxu0
      %v1476 = vadd.f32 %v1437, %v1475
      %v1477 = vpop.f32.mrf.mxu0
      %v1478 = vadd.f32 %v1439, %v1477
      %1479 = vmatmul.bf16.gmra.mxu0 %v1030
      %v1480 = vpop.f32.mrf.mxu0
      %v1481 = vadd.f32 %v1442, %v1480
      %v1482 = vpop.f32.mrf.mxu0
      %v1483 = vadd.f32 %v1444, %v1482
      %1484 = vmatmul.bf16.gmra.mxu0 %v1043
      %v1485 = vpop.f32.mrf.mxu0
      %v1486 = vadd.f32 %v1447, %v1485
      %v1487 = vpop.f32.mrf.mxu0
      %v1488 = vadd.f32 %v1449, %v1487
      %1489 = vdwg.mxu0
      %1490 = vmatpush.bf16.msra.mxu0 %v626
      %1491 = vmatpush.bf16.msra.mxu0 %v625
      %1492 = vmatpush.bf16.msra.mxu0 %v624
      %1493 = vmatpush.bf16.msra.mxu0 %v623
      %1494 = vmatpush.bf16.msra.mxu0 %v622
      %1495 = vmatpush.bf16.msra.mxu0 %v621
      %1496 = vmatpush.bf16.msra.mxu0 %v620
      %1497 = vmatpush.bf16.msra.mxu0 %v619
      %1498 = vmatmul.bf16.gmra.mxu0 %v979
      %v1499 = vpop.f32.mrf.mxu0
      %v1500 = vadd.f32 %v1461, %v1499
      %v1501 = vpop.f32.mrf.mxu0
      %v1502 = vadd.f32 %v1463, %v1501
      %1503 = vmatmul.bf16.gmra.mxu0 %v992
      %v1504 = vpop.f32.mrf.mxu0
      %v1505 = vadd.f32 %v1466, %v1504
      %v1506 = vpop.f32.mrf.mxu0
      %v1507 = vadd.f32 %v1468, %v1506
      %1508 = vmatmul.bf16.gmra.mxu0 %v1005
      %v1509 = vpop.f32.mrf.mxu0
      %v1510 = vadd.f32 %v1471, %v1509
      %v1511 = vpop.f32.mrf.mxu0
      %v1512 = vadd.f32 %v1473, %v1511
      %1513 = vmatmul.bf16.gmra.mxu0 %v1018
      %v1514 = vpop.f32.mrf.mxu0
      %v1515 = vadd.f32 %v1476, %v1514
      %v1516 = vpop.f32.mrf.mxu0
      %v1517 = vadd.f32 %v1478, %v1516
      %1518 = vmatmul.bf16.gmra.mxu0 %v1031
      %v1519 = vpop.f32.mrf.mxu0
      %v1520 = vadd.f32 %v1481, %v1519
      %v1521 = vpop.f32.mrf.mxu0
      %v1522 = vadd.f32 %v1483, %v1521
      %1523 = vmatmul.bf16.gmra.mxu0 %v1044
      %v1524 = vpop.f32.mrf.mxu0
      %v1525 = vadd.f32 %v1486, %v1524
      %v1526 = vpop.f32.mrf.mxu0
      %v1527 = vadd.f32 %v1488, %v1526
      %1528 = vdwg.mxu0
      %1529 = vmatpush.bf16.msra.mxu0 %v634
      %1530 = vmatpush.bf16.msra.mxu0 %v633
      %1531 = vmatpush.bf16.msra.mxu0 %v632
      %1532 = vmatpush.bf16.msra.mxu0 %v631
      %1533 = vmatpush.bf16.msra.mxu0 %v630
      %1534 = vmatpush.bf16.msra.mxu0 %v629
      %1535 = vmatpush.bf16.msra.mxu0 %v628
      %1536 = vmatpush.bf16.msra.mxu0 %v627
      %1537 = vmatmul.bf16.gmra.mxu0 %v980
      %v1538 = vpop.f32.mrf.mxu0
      %v1539 = vadd.f32 %v1500, %v1538
      %v1540 = vpop.f32.mrf.mxu0
      %v1541 = vadd.f32 %v1502, %v1540
      %1542 = vmatmul.bf16.gmra.mxu0 %v993
      %v1543 = vpop.f32.mrf.mxu0
      %v1544 = vadd.f32 %v1505, %v1543
      %v1545 = vpop.f32.mrf.mxu0
      %v1546 = vadd.f32 %v1507, %v1545
      %1547 = vmatmul.bf16.gmra.mxu0 %v1006
      %v1548 = vpop.f32.mrf.mxu0
      %v1549 = vadd.f32 %v1510, %v1548
      %v1550 = vpop.f32.mrf.mxu0
      %v1551 = vadd.f32 %v1512, %v1550
      %1552 = vmatmul.bf16.gmra.mxu0 %v1019
      %v1553 = vpop.f32.mrf.mxu0
      %v1554 = vadd.f32 %v1515, %v1553
      %v1555 = vpop.f32.mrf.mxu0
      %v1556 = vadd.f32 %v1517, %v1555
      %1557 = vmatmul.bf16.gmra.mxu0 %v1032
      %v1558 = vpop.f32.mrf.mxu0
      %v1559 = vadd.f32 %v1520, %v1558
      %v1560 = vpop.f32.mrf.mxu0
      %v1561 = vadd.f32 %v1522, %v1560
      %1562 = vmatmul.bf16.gmra.mxu0 %v1045
      %v1563 = vpop.f32.mrf.mxu0
      %v1564 = vadd.f32 %v1525, %v1563
      %v1565 = vpop.f32.mrf.mxu0
      %v1566 = vadd.f32 %v1527, %v1565
      %1567 = vdwg.mxu0
      %1568 = vmatpush.bf16.msra.mxu0 %v642
      %1569 = vmatpush.bf16.msra.mxu0 %v641
      %1570 = vmatpush.bf16.msra.mxu0 %v640
      %1571 = vmatpush.bf16.msra.mxu0 %v639
      %1572 = vmatpush.bf16.msra.mxu0 %v638
      %1573 = vmatpush.bf16.msra.mxu0 %v637
      %1574 = vmatpush.bf16.msra.mxu0 %v636
      %1575 = vmatpush.bf16.msra.mxu0 %v635
      %1576 = vmatmul.bf16.gmra.mxu0 %v981
      %v1577 = vpop.f32.mrf.mxu0
      %v1578 = vadd.f32 %v1539, %v1577
      %v1579 = vpop.f32.mrf.mxu0
      %v1580 = vadd.f32 %v1541, %v1579
      %1581 = vmatmul.bf16.gmra.mxu0 %v994
      %v1582 = vpop.f32.mrf.mxu0
      %v1583 = vadd.f32 %v1544, %v1582
      %v1584 = vpop.f32.mrf.mxu0
      %v1585 = vadd.f32 %v1546, %v1584
      %1586 = vmatmul.bf16.gmra.mxu0 %v1007
      %v1587 = vpop.f32.mrf.mxu0
      %v1588 = vadd.f32 %v1549, %v1587
      %v1589 = vpop.f32.mrf.mxu0
      %v1590 = vadd.f32 %v1551, %v1589
      %1591 = vmatmul.bf16.gmra.mxu0 %v1020
      %v1592 = vpop.f32.mrf.mxu0
      %v1593 = vadd.f32 %v1554, %v1592
      %v1594 = vpop.f32.mrf.mxu0
      %v1595 = vadd.f32 %v1556, %v1594
      %1596 = vmatmul.bf16.gmra.mxu0 %v1033
      %v1597 = vpop.f32.mrf.mxu0
      %v1598 = vadd.f32 %v1559, %v1597
      %v1599 = vpop.f32.mrf.mxu0
      %v1600 = vadd.f32 %v1561, %v1599
      %1601 = vmatmul.bf16.gmra.mxu0 %v1046
      %v1602 = vpop.f32.mrf.mxu0
      %v1603 = vadd.f32 %v1564, %v1602
      %v1604 = vpop.f32.mrf.mxu0
      %v1605 = vadd.f32 %v1566, %v1604
      %1606 = vdwg.mxu0
      %1607 = vmatpush.bf16.msra.mxu0 0
      %1608 = vmatpush.bf16.msra.mxu0 0
      %1609 = vmatpush.bf16.msra.mxu0 0
      %1610 = vmatpush.bf16.msra.mxu0 0
      %1611 = vmatpush.bf16.msra.mxu0 0
      %1612 = vmatpush.bf16.msra.mxu0 %v645
      %1613 = vmatpush.bf16.msra.mxu0 %v644
      %1614 = vmatpush.bf16.msra.mxu0 %v643
      %1615 = vmatmul.bf16.gmra.mxu0 %v1122
      %v1616 = vpop.f32.mrf.mxu0
      %v1617 = vadd.f32 %v1578, %v1616
      %v1618 = vpop.f32.mrf.mxu0
      %v1619 = vadd.f32 %v1580, %v1618
      %1620 = vmatmul.bf16.gmra.mxu0 %v1125
      %v1621 = vpop.f32.mrf.mxu0
      %v1622 = vadd.f32 %v1583, %v1621
      %v1623 = vpop.f32.mrf.mxu0
      %v1624 = vadd.f32 %v1585, %v1623
      %1625 = vmatmul.bf16.gmra.mxu0 %v1128
      %v1626 = vpop.f32.mrf.mxu0
      %v1627 = vadd.f32 %v1588, %v1626
      %v1628 = vpop.f32.mrf.mxu0
      %v1629 = vadd.f32 %v1590, %v1628
      %1630 = vmatmul.bf16.gmra.mxu0 %v1131
      %v1631 = vpop.f32.mrf.mxu0
      %v1632 = vadd.f32 %v1593, %v1631
      %v1633 = vpop.f32.mrf.mxu0
      %v1634 = vadd.f32 %v1595, %v1633
      %1635 = vmatmul.bf16.gmra.mxu0 %v1134
      %v1636 = vpop.f32.mrf.mxu0
      %v1637 = vadd.f32 %v1598, %v1636
      %v1638 = vpop.f32.mrf.mxu0
      %v1639 = vadd.f32 %v1600, %v1638
      %1640 = vmatmul.bf16.gmra.mxu0 %v1137
      %v1641 = vpop.f32.mrf.mxu0
      %v1642 = vadd.f32 %v1603, %v1641
      %v1643 = vpop.f32.mrf.mxu0
      %v1644 = vadd.f32 %v1605, %v1643
      %1645 = vdwg.mxu0
      %vm1646 = vcmask 400384
      %1647 = vst.msk [vmem:[%s148] sm:$0xff] %vm1646, %v1617
      %1648 = vst.msk [vmem:[%s148 + $0x8] sm:$0xff] %vm1646, %v1619
      %1649 = vst.msk [vmem:[%s148 + $0x10] sm:$0xff] %vm1646, %v1622
      %1650 = vst.msk [vmem:[%s148 + $0x18] sm:$0xff] %vm1646, %v1624
      %1651 = vst.msk [vmem:[%s148 + $0x20] sm:$0xff] %vm1646, %v1627
      %1652 = vst.msk [vmem:[%s148 + $0x28] sm:$0xff] %vm1646, %v1629
      %1653 = vst.msk [vmem:[%s148 + $0x30] sm:$0xff] %vm1646, %v1632
      %1654 = vst.msk [vmem:[%s148 + $0x38] sm:$0xff] %vm1646, %v1634
      %1655 = vst.msk [vmem:[%s148 + $0x40] sm:$0xff] %vm1646, %v1637
      %1656 = vst.msk [vmem:[%s148 + $0x48] sm:$0xff] %vm1646, %v1639
      %1657 = vst.msk [vmem:[%s148 + $0x50] sm:$0xff] %vm1646, %v1642
      %1658 = vst.msk [vmem:[%s148 + $0x58] sm:$0xff] %vm1646, %v1644
      %s1659 = smul.u32 12, %s13
      %p1660 = scmp.lt.s32.totalorder %s1659, 23
      %s1661 = scalar_select %p1660, %s1659, 23
      %s1662 = smul.addr %s1661, 8
      %s1663 = scalar_lea.vmem %s2, %s1662
      // Predicated region
      $region29: #{tpu_custom_call.1} parent=27 // pred_check
        %p1664 = pneg %p78
      $region30: #{tpu_custom_call.1} parent=27 // pred_check_branch
        %1666 = sbr.rel (%p1664) target = $region32
      $region31: #{tpu_custom_call.1} parent=27 // pred_region
        %s1667 = smul.u32 12, %s13
      $region32: #{tpu_custom_call.1} parent=27 // pred_fallthru
        _
    $region28: #{tpu_custom_call.1} parent=5 // pred_fallthru
      _
    %p1668 = scmp.le.s32.totalorder 2, %s8
    // Predicated region
    $region33: #{tpu_custom_call.1} parent=5 // pred_check
      %p1669 = pneg %p1668
    $region34: #{tpu_custom_call.1} parent=5 // pred_check_branch
      %1671 = sbr.rel (%p1669) target = $region36
    $region35: #{tpu_custom_call.1} parent=5 // pred_region
      %s1672 = ssub.s32 %s8, 2
      // Predicated region
      $region37: #{tpu_custom_call.1} parent=35 // pred_check
        %p1673 = pneg %p84
      $region38: #{tpu_custom_call.1} parent=35 // pred_check_branch
        %1675 = sbr.rel (%p1673) target = $region40
      $region39: #{tpu_custom_call.1} parent=35 // pred_region
        %s1676 = smul.u32 12, %s14
        %p1677 = scmp.lt.s32.totalorder %s1676, 23
        %s1678 = scalar_select %p1677, %s1676, 23
        %s1679 = smul.addr %s1678, 8
        %s1680 = scalar_lea.vmem %s2, %s1679
      $region40: #{tpu_custom_call.1} parent=35 // pred_fallthru
        _
    $region36: #{tpu_custom_call.1} parent=5 // pred_fallthru
      _
  $region6: #{tpu_custom_call.1} parent=0 // loop_footer
    %s12 = sadd.s32 1, %s8
  $region7: #{tpu_custom_call.1} parent=0 // loop_footer_branch
    %7 = sbr.rel target = $region3
  $region8: #{tpu_custom_call.1} parent=0 // loop_exit
    _

</llo_original>
